<compile_context>
chip_gen: v6e
topology: v6e:2x2x1
jax: 0.10.0
libtpu: 0.0.40
codegen_flags: <defaults>
</compile_context>

<pallas_src>
import functools

import jax
import jax.numpy as jnp
from jax import lax
from jax.experimental import pallas as pl
from jax.experimental.pallas import tpu as pltpu

_LN_EPS = 1e-5          # torch.nn.LayerNorm default
_NEG = -1e30            # masked-logit fill


def _layer_norm(v, gamma, beta):
    """Two-pass LayerNorm used by the pure-JAX reference."""
    mu = jnp.mean(v, axis=-1, keepdims=True)
    var = jnp.mean((v - mu) ** 2, axis=-1, keepdims=True)
    return (v - mu) * lax.rsqrt(var + _LN_EPS) * gamma + beta


def _chip_config():
    """Chip-aware VMEM limit / tiling budget / pair-compute dtype.

    Conservative (v7x-sized, f32) fallbacks are used when the queries fail."""
    vmem_cap = None
    try:
        vmem_cap = int(pltpu.get_tpu_info().vmem_capacity_bytes)
    except Exception:
        pass
    kind = ""
    try:
        kind = jax.devices()[0].device_kind.lower()
    except Exception:
        pass
    if vmem_cap is not None:
        big_vmem = vmem_cap > 96 * 1024 * 1024           # v4/v5e/v6e: 128 MiB
    else:
        big_vmem = any(t in kind for t in ("v4", "v5", "v6"))
    vmem_limit = (96 if big_vmem else 40) * 1024 * 1024  # v7x: only 64 MiB physical
    budget = (56 if big_vmem else 20) * 1024 * 1024      # live-bytes target for tiling
    # bf16 VALU exists on v6e / v7x; keep f32 elementwise math on v5e and older.
    bf16_pairs = any(t in kind for t in ("v6", "v7", "7x"))
    return vmem_limit, budget, bf16_pairs


def _pick_src_chunk(n, window):
    """Smallest lane-aligned (128) source chunk giving at most 8 chunks
    (16 when windowed).  Dead chunks (non-causal / outside the window band)
    are skipped inside the kernel."""
    cap = 16 if window is not None else 8
    best = n
    for c in range(2, cap + 1):
        if n % c == 0 and (n // c) % 128 == 0:
            best = n // c
    return best


def _pick_sink_tile(n, f, src_chunk, pair_bytes, out_bytes, budget_bytes, batch):
    """Largest sink tile (multiple of 8, divides N, <=512) whose live VMEM
    footprint stays inside the chip-aware budget."""
    per_row = (src_chunk * f * (pair_bytes + 2 + 4 + 4)   # h3 + hn(bf16) + h2(f32) + temps
               + n * (4 + 2 * out_bytes)                  # logit scratch + dbl-buffered out
               + 2 * f * pair_bytes)                      # dbl-buffered sink projection
    fixed = 2 * n * f * pair_bytes + 2 * f * f * 2 + 8 * f * 4
    avail = max(budget_bytes - fixed, 8 * per_row)
    rows = int(avail // max(per_row, 1))
    if rows >= n:
        ts = n
    else:
        ts = 0
        cap = max(8, min(512, (rows // 8) * 8))
        t = cap
        while t >= 8:
            if n % t == 0:
                ts = t
                break
            t -= 8
        if ts == 0:
            ts = n
    # v7x has two TensorCores: make sure a B == 1 call still yields >= 2
    # parallel grid steps so both cores get work.
    if batch == 1 and ts == n and n >= 16:
        t = (n // 2 // 8) * 8
        while t >= 8:
            if n % t == 0:
                ts = t
                break
            t -= 8
    return ts


def _learned_edge_kernel(t_ref, taus_ref, sinkp_ref, srcp_ref, w2_ref, vecs_ref,
                         misc_ref, out_ref, logit_ref, *, window, src_chunk):
    b = pl.program_id(0)
    tile = pl.program_id(1)
    TS = out_ref.shape[1]            # sink rows handled by this grid step
    N = out_ref.shape[2]             # total nodes (== #source candidates)
    F = srcp_ref.shape[2]
    SC = src_chunk
    n_chunks = N // SC

    s0 = tile * TS                   # first (global) sink row of this tile
    t = t_ref[b]
    tc = taus_ref[b]

    # A tile has work iff some sink i in [s0, s0+TS) satisfies t <= i < t+tc and
    # i >= 1 (a sink needs at least one strictly-earlier source).  This also
    # covers the module's (T+taus).max() <= 1 early-return (everything is dead).
    lo = jnp.maximum(jnp.maximum(s0, t), 1)
    hi = jnp.minimum(s0 + TS, t + tc)
    has_work = lo < hi

    @pl.when(jnp.logical_not(has_work))
    def _zero():
        out_ref[...] = jnp.zeros(out_ref.shape, out_ref.dtype)

    @pl.when(has_work)
    def _compute():
        vecs = vecs_ref[...]                       # (8, F) f32 packed vectors
        b2 = vecs[0]                               # b2 + be1 @ W2.T   (LN1 affine folded)
        gw = vecs[1]                               # g2 * w3           (LN2 fold)
        inv_tau = misc_ref[0]
        cutoff = misc_ref[1]
        sgw = misc_ref[2]                          # sum(g2 * w3)
        const = misc_ref[3]                        # dot(be2, w3) + b3

        sink = sinkp_ref[0]                        # (TS, F) pair dtype, incl. b1
        w2 = w2_ref[...]                           # (F, F)  bf16, g1 folded in
        inv_f = jnp.float32(1.0 / F)
        neg = jnp.float32(_NEG)

        # Masked / dead-chunk columns start at -inf-ish in the logits scratch.
        logit_ref[...] = jnp.full(logit_ref.shape, neg, logit_ref.dtype)

        src_hi = hi                                # sources satisfy j < i < hi
        if window is not None:
            src_lo = jnp.maximum(lo - window, 0)   # and j >= i - window >= lo - window

        # Static source chunks: offsets are compile-time constants, liveness is a
        # cheap scalar test, and dead chunks skip all F-heavy work.
        for c in range(n_chunks):
            c0 = c * SC
            if window is None:
                live = c0 < src_hi
            else:
                live = (c0 < src_hi) & (c0 + SC > src_lo)

            @pl.when(live)
            def _chunk(c0=c0):
                src = srcp_ref[0, c0:c0 + SC, :]                           # (SC, F)
                # ---- Linear1 pair sum (precomputed halves) + ReLU.
                h3 = jnp.maximum(sink[:, None, :] + src[None, :, :], 0)    # (TS,SC,F)
                # ---- LayerNorm1 statistics in f32; affine folded into W2/b2.
                s1 = jnp.sum(h3, axis=-1, dtype=jnp.float32, keepdims=True) * inv_f
                s2 = jnp.sum(h3 * h3, axis=-1, dtype=jnp.float32, keepdims=True) * inv_f
                inv_std = lax.rsqrt(s2 - s1 * s1 + _LN_EPS)
                hn = ((h3 - s1.astype(h3.dtype)) * inv_std.astype(h3.dtype)
                      ).astype(jnp.bfloat16)
                # ---- Linear(F -> F) + ReLU (bf16 operands, f32 accumulation).
                h2 = jnp.dot(hn.reshape(TS * SC, F), w2,
                             preferred_element_type=jnp.float32)
                h2 = jnp.maximum(h2 + b2, 0.0).reshape(TS, SC, F)
                # ---- LayerNorm2 + Linear(F -> 1) + b3, folded algebraically;
                # the normalized tensor is never materialized, three lane
                # reductions land directly in (TS, SC) layout.
                m1 = jnp.sum(h2, axis=-1) * inv_f
                m2 = jnp.sum(h2 * h2, axis=-1) * inv_f
                ws = jnp.sum(h2 * gw, axis=-1)
                logits = lax.rsqrt(m2 - m1 * m1 + _LN_EPS) * (ws - m1 * sgw) + const
                # ---- Causal (+ window) mask, tempered logits into the scratch.
                i_idx = s0 + lax.broadcasted_iota(jnp.int32, (TS, SC), 0)
                j_idx = c0 + lax.broadcasted_iota(jnp.int32, (TS, SC), 1)
                valid = (i_idx >= t) & (i_idx < t + tc) & (j_idx < i_idx)
                if window is not None:
                    valid = valid & (j_idx >= i_idx - window)
                logit_ref[:, c0:c0 + SC] = jnp.where(valid, logits * inv_tau, neg)

        # ---- Full-width tempered softmax + cutoff (cheap: no F factor).
        ml = logit_ref[...]                                     # (TS, N)
        row_max = jnp.max(ml, axis=-1, keepdims=True)
        p = jnp.where(ml > jnp.float32(-1e29), jnp.exp(ml - row_max), 0.0)
        denom = jnp.sum(p, axis=-1, keepdims=True)
        # soft > cutoff  <=>  p > cutoff * denom   (division-free).
        adj = jnp.where(p > cutoff * denom, 1.0, 0.0)
        out_ref[0] = adj.astype(out_ref.dtype)


def learned_edge_forward(nodes, T, taus, params, *, num_edge_samples=5,
                         tau_param=1.0, temp_bounds=(0.001, 5.0), window=None,
                         sink_tile=None, src_chunk=None, pair_dtype=None,
                         out_dtype=jnp.float32):
    """Dense-adjacency forward of LearnedEdge (deterministic tempered-softmax path)."""
    W1, b1, g1, be1, W2, b2, g2, be2, W3, b3 = params
    B, N, F = nodes.shape

    # tau_param.data.clamp_(*temp_bounds) -- static host value, as in the module.
    # TODO(synk): rework if tau_param ever becomes a traced/learned array.
    tau = float(min(max(float(tau_param), temp_bounds[0]), temp_bounds[1]))
    cutoff = 1.0 / (1.0 + num_edge_samples)

    vmem_limit, budget, bf16_pairs = _chip_config()
    if pair_dtype is None:
        pair_dtype = jnp.bfloat16 if bf16_pairs else jnp.float32
    pair_bytes = jnp.dtype(pair_dtype).itemsize
    out_bytes = jnp.dtype(out_dtype).itemsize

    # ---- Wrapper-side Linear1 precompute (one batched XLA matmul per half);
    # hoists the per-sink-tile source-projection recompute out of the kernel.
    nodes_f = jnp.asarray(nodes, jnp.float32)
    W1f = jnp.asarray(W1, jnp.float32)                              # (F, 2F) = [sink | source]
    b1f = jnp.asarray(b1, jnp.float32).reshape(F)
    sinkp = (nodes_f @ W1f[:, :F].T + b1f).astype(pair_dtype)       # (B, N, F)
    srcp = (nodes_f @ W1f[:, F:].T).astype(pair_dtype)              # (B, N, F)

    # ---- LayerNorm1 affine folded into Linear2 (kernel only normalizes).
    W2f = jnp.asarray(W2, jnp.float32)
    g1f = jnp.asarray(g1, jnp.float32).reshape(F)
    be1f = jnp.asarray(be1, jnp.float32).reshape(F)
    w2_fold = (W2f * g1f[None, :]).T.astype(jnp.bfloat16)           # (F, F): hn @ w2_fold
    b2_fold = jnp.asarray(b2, jnp.float32).reshape(F) + be1f @ W2f.T

    # ---- LayerNorm2 + Linear(F->1) folded algebraically.
    w3_row = jnp.asarray(W3, jnp.float32).reshape(F)
    gw = jnp.asarray(g2, jnp.float32).reshape(F) * w3_row
    sgw = jnp.sum(gw)
    const = (jnp.dot(jnp.asarray(be2, jnp.float32).reshape(F), w3_row)
             + jnp.asarray(b3, jnp.float32).reshape(-1)[0])

    zeros = jnp.zeros((F,), jnp.float32)
    vecs = jnp.stack([b2_fold, gw, zeros, zeros, zeros, zeros, zeros, zeros])    # (8, F)
    misc = jnp.stack([jnp.float32(1.0 / tau), jnp.float32(cutoff), sgw, const])  # (4,)

    SC = int(src_chunk) if src_chunk is not None else _pick_src_chunk(N, window)
    assert N % SC == 0 and SC % 8 == 0, "source chunk must divide N and be a multiple of 8"
    TILE_S = (int(sink_tile) if sink_tile is not None
              else _pick_sink_tile(N, F, SC, pair_bytes, out_bytes, budget, B))
    assert N % TILE_S == 0, "sink tile must divide N"
    num_tiles = N // TILE_S

    kernel = functools.partial(_learned_edge_kernel, window=window, src_chunk=SC)

    return pl.pallas_call(
        kernel,
        grid=(B, num_tiles),
        in_specs=[
            pl.BlockSpec(memory_space=pltpu.SMEM),                  # T      int32 (B,)
            pl.BlockSpec(memory_space=pltpu.SMEM),                  # taus   int32 (B,)
            pl.BlockSpec((1, TILE_S, F), lambda b, s: (b, s, 0)),   # sink projection (+b1)
            pl.BlockSpec((1, N, F), lambda b, s: (b, 0, 0)),        # source projection
            pl.BlockSpec((F, F), lambda b, s: (0, 0)),              # g1-folded W2^T, bf16
            pl.BlockSpec((8, F), lambda b, s: (0, 0)),              # [b2', g2*w3, ...] f32
            pl.BlockSpec(memory_space=pltpu.SMEM),                  # [1/tau, cutoff, sgw, const]
        ],
        out_specs=pl.BlockSpec((1, TILE_S, N), lambda b, s: (b, s, 0)),
        out_shape=jax.ShapeDtypeStruct((B, N, N), out_dtype),
        scratch_shapes=[pltpu.VMEM((TILE_S, N), jnp.float32)],      # masked logits
        compiler_params=pltpu.CompilerParams(
            dimension_semantics=("parallel", "parallel"),
            vmem_limit_bytes=vmem_limit),
    )(jnp.asarray(T, jnp.int32), jnp.asarray(taus, jnp.int32),
      sinkp, srcp, w2_fold, vecs, misc)


def init_params(key, input_size):
    """Deterministic edge-network params (orthogonal Linear weights, as in init_weights)."""
    F = input_size
    ortho = jax.nn.initializers.orthogonal()
    k = jax.random.split(key, 6)
    W1 = ortho(k[0], (F, 2 * F), jnp.float32)   # Linear(2F, F).weight
    W2 = ortho(k[1], (F, F), jnp.float32)       # Linear(F, F).weight
    W3 = ortho(k[2], (1, F), jnp.float32)       # Linear(F, 1).weight
    b1 = jax.random.uniform(k[3], (F,), jnp.float32, -0.05, 0.05)
    b2 = jax.random.uniform(k[4], (F,), jnp.float32, -0.05, 0.05)
    b3 = jax.random.uniform(k[5], (1,), jnp.float32, -0.05, 0.05)
    g1 = jnp.ones((F,), jnp.float32)
    be1 = jnp.zeros((F,), jnp.float32)
    g2 = jnp.ones((F,), jnp.float32)
    be2 = jnp.zeros((F,), jnp.float32)
    return (W1, b1, g1, be1, W2, b2, g2, be2, W3, b3)


def reference_forward(nodes, T, taus, params, *, num_edge_samples=5, tau=1.0, window=None):
    """Pure-JAX reference mirroring the torch forward (deterministic path, f32)."""
    W1, b1, g1, be1, W2, b2, g2, be2, W3, b3 = params
    B, N, F = nodes.shape
    sink = jnp.broadcast_to(nodes[:, :, None, :], (B, N, N, F))
    src = jnp.broadcast_to(nodes[:, None, :, :], (B, N, N, F))
    cat = jnp.concatenate([sink, src], axis=-1)
    h = jnp.maximum(cat @ W1.T + b1, 0.0)
    h = _layer_norm(h, g1, be1)
    h = jnp.maximum(h @ W2.T + b2, 0.0)
    h = _layer_norm(h, g2, be2)
    logits = (h @ W3.T)[..., 0] + b3[0]
    i = jnp.arange(N)[None, :, None]
    j = jnp.arange(N)[None, None, :]
    valid = (i >= T[:, None, None]) & (i < (T + taus)[:, None, None]) & (j < i)
    if window is not None:
        valid = valid & (j >= i - window)
    ml = jnp.where(valid, logits / tau, -1e30)
    p = jnp.where(valid, jnp.exp(ml - jnp.max(ml, axis=-1, keepdims=True)), 0.0)
    soft = p / jnp.maximum(jnp.sum(p, axis=-1, keepdims=True), 1e-30)
    cutoff = 1.0 / (1.0 + num_edge_samples)
    adj = jnp.where(valid & (soft > cutoff), 1.0, 0.0)
    return adj, soft


if __name__ == "__main__":
    key = jax.random.PRNGKey(0)
    B, N, F = 2, 16, 128
    k_nodes, k_params = jax.random.split(key)

    nodes = jax.random.normal(k_nodes, (B, N, F), jnp.float32)
    T = jnp.array([3, 0], jnp.int32)       # existing node counts per batch
    taus = jnp.array([2, 4], jnp.int32)    # new nodes per batch
    params = init_params(k_params, F)

    cutoff = 1.0 / 6.0
    # Margin excludes edges whose reference soft-value sits near the cutoff,
    # where the kernel's bf16 matmuls / bf16 pair intermediates could
    # legitimately flip the decision.
    MARGIN = 2.5e-2

    adj_ref, soft_ref = reference_forward(nodes, T, taus, params,
                                          num_edge_samples=5, tau=1.0, window=None)
    ok = jnp.abs(soft_ref - cutoff) > MARGIN

    # 1) auto config (chip-aware pair dtype / sink tile / source chunk).
    adj = jax.block_until_ready(
        learned_edge_forward(nodes, T, taus, params, num_edge_samples=5,
                             tau_param=1.0, window=None))
    assert adj.shape == (B, N, N)
    assert bool(jnp.all(jnp.isfinite(adj)))
    assert bool(jnp.all((adj == 0.0) | (adj == 1.0)))
    assert bool(jnp.all(jnp.where(ok, adj == adj_ref, True)))

    # 2) forced multi-tile + multi-chunk + f32 pair path (exercises the
    #    dead-tile and dead-source-chunk gates).
    adj_t = jax.block_until_ready(
        learned_edge_forward(nodes, T, taus, params, num_edge_samples=5,
                             tau_param=1.0, window=None, sink_tile=8,
                             src_chunk=8, pair_dtype=jnp.float32))
    assert bool(jnp.all(jnp.where(ok, adj_t == adj_ref, True)))

    # 3) windowed causal edges with chunked source-band skipping.
    adj_wref, soft_wref = reference_forward(nodes, T, taus, params,
                                            num_edge_samples=5, tau=1.0, window=3)
    ok_w = jnp.abs(soft_wref - cutoff) > MARGIN
    adj_w = jax.block_until_ready(
        learned_edge_forward(nodes, T, taus, params, num_edge_samples=5,
                             tau_param=1.0, window=3, src_chunk=8))
    assert bool(jnp.all(jnp.where(ok_w, adj_w == adj_wref, True)))

    # 4) (T + taus).max() <= 1  ->  empty adjacency (all tiles gated off).
    adj_e = jax.block_until_ready(
        learned_edge_forward(nodes, jnp.zeros((B,), jnp.int32),
                             jnp.ones((B,), jnp.int32), params))
    assert bool(jnp.all(adj_e == 0.0))

    print("KERNEL_OK")
</pallas_src>

<mosaic_0001>
module attributes {stable_mosaic.version = 11 : i64} {
  func.func @_learned_edge_kernel(%arg0: i32, %arg1: i32, %arg2: memref<2xi32, #tpu.memory_space<smem>>, %arg3: memref<2xi32, #tpu.memory_space<smem>>, %arg4: memref<1x16x128xf32, #tpu.memory_space<vmem>>, %arg5: memref<1x16x128xf32, #tpu.memory_space<vmem>>, %arg6: memref<128x128xbf16, #tpu.memory_space<vmem>>, %arg7: memref<8x128xf32, #tpu.memory_space<vmem>>, %arg8: memref<4xf32, #tpu.memory_space<smem>>, %arg9: memref<1x16x16xf32, #tpu.memory_space<vmem>>, %arg10: memref<16x16xf32, #tpu.memory_space<vmem>>) attributes {dimension_semantics = [#tpu.dimension_semantics<parallel>, #tpu.dimension_semantics<parallel>], iteration_bounds = array<i64: 2, 1>, scalar_prefetch = 0 : i64, scratch_operands = 1 : i64, tpu.core_type = #tpu.core_type<tc>, window_params = [{transform_indices = @transform_0, window_bounds = array<i64: 2>}, {transform_indices = @transform_1, window_bounds = array<i64: 2>}, {transform_indices = @transform_2, window_bounds = array<i64: 1, 16, 128>}, {transform_indices = @transform_3, window_bounds = array<i64: 1, 16, 128>}, {pipeline_mode = #tpu.pipeline_mode<synchronous>, transform_indices = @transform_4, window_bounds = array<i64: 128, 128>}, {pipeline_mode = #tpu.pipeline_mode<synchronous>, transform_indices = @transform_5, window_bounds = array<i64: 8, 128>}, {transform_indices = @transform_6, window_bounds = array<i64: 4>}, {transform_indices = @transform_7, window_bounds = array<i64: 1, 16, 16>}]} {
    %c16_i32 = arith.constant 16 : i32
    %0 = arith.muli %arg1, %c16_i32 : i32
    %1 = arith.index_cast %arg0 : i32 to index
    %2 = memref.load %arg2[%1] : memref<2xi32, #tpu.memory_space<smem>>
    %3 = arith.index_cast %arg0 : i32 to index
    %4 = memref.load %arg3[%3] : memref<2xi32, #tpu.memory_space<smem>>
    %5 = arith.maxsi %0, %2 : i32
    %c1_i32 = arith.constant 1 : i32
    %6 = arith.maxsi %5, %c1_i32 : i32
    %c16_i32_0 = arith.constant 16 : i32
    %7 = arith.addi %0, %c16_i32_0 : i32
    %8 = arith.addi %2, %4 : i32
    %9 = arith.minsi %7, %8 : i32
    %10 = arith.cmpi slt, %6, %9 : i32
    %true = arith.constant true
    %11 = arith.xori %10, %true : i1
    %12 = arith.extui %11 : i1 to i32
    %c0_i32 = arith.constant 0 : i32
    %13 = arith.cmpi ne, %12, %c0_i32 : i32
    scf.if %13 {
      %cst = arith.constant 0.000000e+00 : f32
      %16 = vector.broadcast %cst : f32 to vector<1x16x16xf32>
      %c0 = arith.constant 0 : index
      %c0_2 = arith.constant 0 : index
      %c0_3 = arith.constant 0 : index
      %17 = vector.load %arg9[%c0, %c0_2, %c0_3] : memref<1x16x16xf32, #tpu.memory_space<vmem>>, vector<1x16x16xf32>
      tpu.vector_store %arg9[%c0, %c0_2, %c0_3], %16 {strides = array<i32>} : memref<1x16x16xf32, #tpu.memory_space<vmem>>, vector<1x16x16xf32>,
    } else {
    }
    %14 = arith.extui %10 : i1 to i32
    %c0_i32_1 = arith.constant 0 : i32
    %15 = arith.cmpi ne, %14, %c0_i32_1 : i32
    scf.if %15 {
      %c0 = arith.constant 0 : index
      %c0_2 = arith.constant 0 : index
      %16 = vector.load %arg7[%c0, %c0_2] : memref<8x128xf32, #tpu.memory_space<vmem>>, vector<8x128xf32>
      %17 = vector.extract_strided_slice %16 {offsets = [0, 0], sizes = [1, 128], strides = [1, 1]} : vector<8x128xf32> to vector<1x128xf32>
      %18 = vector.shape_cast %17 : vector<1x128xf32> to vector<128xf32>
      %19 = vector.extract_strided_slice %16 {offsets = [1, 0], sizes = [1, 128], strides = [1, 1]} : vector<8x128xf32> to vector<1x128xf32>
      %20 = vector.shape_cast %19 : vector<1x128xf32> to vector<128xf32>
      %c0_3 = arith.constant 0 : index
      %21 = memref.load %arg8[%c0_3] : memref<4xf32, #tpu.memory_space<smem>>
      %c1 = arith.constant 1 : index
      %22 = memref.load %arg8[%c1] : memref<4xf32, #tpu.memory_space<smem>>
      %c2 = arith.constant 2 : index
      %23 = memref.load %arg8[%c2] : memref<4xf32, #tpu.memory_space<smem>>
      %c3 = arith.constant 3 : index
      %24 = memref.load %arg8[%c3] : memref<4xf32, #tpu.memory_space<smem>>
      %c0_4 = arith.constant 0 : index
      %c0_5 = arith.constant 0 : index
      %c0_6 = arith.constant 0 : index
      %25 = vector.load %arg4[%c0_4, %c0_5, %c0_6] : memref<1x16x128xf32, #tpu.memory_space<vmem>>, vector<1x16x128xf32>
      %26 = vector.shape_cast %25 : vector<1x16x128xf32> to vector<16x128xf32>
      %c0_7 = arith.constant 0 : index
      %c0_8 = arith.constant 0 : index
      %27 = vector.load %arg6[%c0_7, %c0_8] : memref<128x128xbf16, #tpu.memory_space<vmem>>, vector<128x128xbf16>
      %cst = arith.constant -1.000000e+30 : f32
      %28 = vector.broadcast %cst : f32 to vector<16x16xf32>
      %c0_9 = arith.constant 0 : index
      %c0_10 = arith.constant 0 : index
      %29 = vector.load %arg10[%c0_9, %c0_10] : memref<16x16xf32, #tpu.memory_space<vmem>>, vector<16x16xf32>
      tpu.vector_store %arg10[%c0_9, %c0_10], %28 {strides = array<i32>} : memref<16x16xf32, #tpu.memory_space<vmem>>, vector<16x16xf32>,
      %c0_i32_11 = arith.constant 0 : i32
      %30 = arith.cmpi sgt, %9, %c0_i32_11 : i32
      %31 = arith.extui %30 : i1 to i32
      %cst_12 = arith.constant 7.812500e-03 : f32
      %cst_13 = arith.constant -1.000000e+30 : f32
      %c0_i32_14 = arith.constant 0 : i32
      %32 = arith.cmpi ne, %31, %c0_i32_14 : i32
      scf.if %32 {
        %c0_26 = arith.constant 0 : index
        %c0_27 = arith.constant 0 : index
        %c0_28 = arith.constant 0 : index
        %55 = vector.load %arg5[%c0_26, %c0_27, %c0_28] : memref<1x16x128xf32, #tpu.memory_space<vmem>>, vector<1x16x128xf32>
        %56 = vector.shape_cast %55 : vector<1x16x128xf32> to vector<16x128xf32>
        %57 = vector.shape_cast %26 : vector<16x128xf32> to vector<16x1x128xf32>
        %58 = vector.shape_cast %56 : vector<16x128xf32> to vector<1x16x128xf32>
        %59 = vector.broadcast %57 : vector<16x1x128xf32> to vector<16x16x128xf32>
        %60 = vector.broadcast %58 : vector<1x16x128xf32> to vector<16x16x128xf32>
        %61 = arith.addf %59, %60 : vector<16x16x128xf32>
        %cst_29 = arith.constant 0.000000e+00 : f32
        %62 = vector.broadcast %cst_29 : f32 to vector<16x16x128xf32>
        %63 = arith.maximumf %61, %62 : vector<16x16x128xf32>
        %cst_30 = arith.constant dense<0.000000e+00> : vector<16x16xf32>
        %64 = vector.multi_reduction <add>, %63, %cst_30 [2] : vector<16x16x128xf32> to vector<16x16xf32>
        %65 = vector.shape_cast %64 : vector<16x16xf32> to vector<16x16x1xf32>
        %66 = vector.broadcast %cst_12 : f32 to vector<16x16x1xf32>
        %67 = arith.mulf %65, %66 : vector<16x16x1xf32>
        %68 = arith.mulf %63, %63 : vector<16x16x128xf32>
        %cst_31 = arith.constant dense<0.000000e+00> : vector<16x16xf32>
        %69 = vector.multi_reduction <add>, %68, %cst_31 [2] : vector<16x16x128xf32> to vector<16x16xf32>
        %70 = vector.shape_cast %69 : vector<16x16xf32> to vector<16x16x1xf32>
        %71 = vector.broadcast %cst_12 : f32 to vector<16x16x1xf32>
        %72 = arith.mulf %70, %71 : vector<16x16x1xf32>
        %73 = arith.mulf %67, %67 : vector<16x16x1xf32>
        %74 = arith.subf %72, %73 : vector<16x16x1xf32>
        %cst_32 = arith.constant 9.99999974E-6 : f32
        %75 = vector.broadcast %cst_32 : f32 to vector<16x16x1xf32>
        %76 = arith.addf %74, %75 : vector<16x16x1xf32>
        %77 = math.rsqrt %76 : vector<16x16x1xf32>
        %78 = vector.broadcast %67 : vector<16x16x1xf32> to vector<16x16x128xf32>
        %79 = arith.subf %63, %78 : vector<16x16x128xf32>
        %80 = vector.broadcast %77 : vector<16x16x1xf32> to vector<16x16x128xf32>
        %81 = arith.mulf %79, %80 : vector<16x16x128xf32>
        %82 = arith.truncf %81 : vector<16x16x128xf32> to vector<16x16x128xbf16>
        %83 = vector.shape_cast %82 : vector<16x16x128xbf16> to vector<256x128xbf16>
        %cst_33 = arith.constant dense<0.000000e+00> : vector<256x128xf32>
        %84 = tpu.matmul %83, %27, %cst_33 {dimension_numbers = #tpu.dot_dimension_numbers<[1], [0], [0], [1], [0, 0, 1, 1], [], []>} : vector<256x128xbf16>, vector<128x128xbf16>, vector<256x128xf32> -> vector<256x128xf32>
        %85 = vector.shape_cast %18 : vector<128xf32> to vector<1x128xf32>
        %86 = vector.broadcast %85 : vector<1x128xf32> to vector<256x128xf32>
        %87 = arith.addf %84, %86 : vector<256x128xf32>
        %cst_34 = arith.constant 0.000000e+00 : f32
        %88 = vector.broadcast %cst_34 : f32 to vector<256x128xf32>
        %89 = arith.maximumf %87, %88 : vector<256x128xf32>
        %90 = vector.shape_cast %89 : vector<256x128xf32> to vector<16x16x128xf32>
        %cst_35 = arith.constant dense<0.000000e+00> : vector<16x16xf32>
        %91 = vector.multi_reduction <add>, %90, %cst_35 [2] : vector<16x16x128xf32> to vector<16x16xf32>
        %92 = vector.broadcast %cst_12 : f32 to vector<16x16xf32>
        %93 = arith.mulf %91, %92 : vector<16x16xf32>
        %94 = arith.mulf %90, %90 : vector<16x16x128xf32>
        %cst_36 = arith.constant dense<0.000000e+00> : vector<16x16xf32>
        %95 = vector.multi_reduction <add>, %94, %cst_36 [2] : vector<16x16x128xf32> to vector<16x16xf32>
        %96 = vector.broadcast %cst_12 : f32 to vector<16x16xf32>
        %97 = arith.mulf %95, %96 : vector<16x16xf32>
        %98 = vector.shape_cast %20 : vector<128xf32> to vector<1x1x128xf32>
        %99 = vector.broadcast %98 : vector<1x1x128xf32> to vector<16x16x128xf32>
        %100 = arith.mulf %90, %99 : vector<16x16x128xf32>
        %cst_37 = arith.constant dense<0.000000e+00> : vector<16x16xf32>
        %101 = vector.multi_reduction <add>, %100, %cst_37 [2] : vector<16x16x128xf32> to vector<16x16xf32>
        %102 = arith.mulf %93, %93 : vector<16x16xf32>
        %103 = arith.subf %97, %102 : vector<16x16xf32>
        %cst_38 = arith.constant 9.99999974E-6 : f32
        %104 = vector.broadcast %cst_38 : f32 to vector<16x16xf32>
        %105 = arith.addf %103, %104 : vector<16x16xf32>
        %106 = math.rsqrt %105 : vector<16x16xf32>
        %107 = vector.broadcast %23 : f32 to vector<16x16xf32>
        %108 = arith.mulf %93, %107 : vector<16x16xf32>
        %109 = arith.subf %101, %108 : vector<16x16xf32>
        %110 = arith.mulf %106, %109 : vector<16x16xf32>
        %111 = vector.broadcast %24 : f32 to vector<16x16xf32>
        %112 = arith.addf %110, %111 : vector<16x16xf32>
        %113 = tpu.iota {dimensions = array<i32: 0>} : vector<16x16xi32>
        %114 = vector.broadcast %0 : i32 to vector<16x16xi32>
        %115 = arith.addi %114, %113 : vector<16x16xi32>
        %116 = tpu.iota {dimensions = array<i32: 1>} : vector<16x16xi32>
        %c0_i32_39 = arith.constant 0 : i32
        %117 = vector.broadcast %c0_i32_39 : i32 to vector<16x16xi32>
        %118 = arith.addi %117, %116 : vector<16x16xi32>
        %119 = vector.broadcast %2 : i32 to vector<16x16xi32>
        %120 = arith.cmpi sge, %115, %119 : vector<16x16xi32>
        %121 = arith.addi %2, %4 : i32
        %122 = vector.broadcast %121 : i32 to vector<16x16xi32>
        %123 = arith.cmpi slt, %115, %122 : vector<16x16xi32>
        %124 = arith.andi %120, %123 : vector<16x16xi1>
        %125 = arith.cmpi slt, %118, %115 : vector<16x16xi32>
        %126 = arith.andi %124, %125 : vector<16x16xi1>
        %127 = vector.broadcast %21 : f32 to vector<16x16xf32>
        %128 = arith.mulf %112, %127 : vector<16x16xf32>
        %129 = vector.broadcast %cst_13 : f32 to vector<16x16xf32>
        %130 = arith.select %126, %128, %129 : vector<16x16xi1>, vector<16x16xf32>
        %c0_40 = arith.constant 0 : index
        %c0_41 = arith.constant 0 : index
        %131 = vector.load %arg10[%c0_40, %c0_41] : memref<16x16xf32, #tpu.memory_space<vmem>>, vector<16x16xf32>
        tpu.vector_store %arg10[%c0_40, %c0_41], %130 {strides = array<i32>} : memref<16x16xf32, #tpu.memory_space<vmem>>, vector<16x16xf32>,
      } else {
      }
      %c0_15 = arith.constant 0 : index
      %c0_16 = arith.constant 0 : index
      %33 = vector.load %arg10[%c0_15, %c0_16] : memref<16x16xf32, #tpu.memory_space<vmem>>, vector<16x16xf32>
      %cst_17 = arith.constant dense<0xFF800000> : vector<16xf32>
      %34 = vector.multi_reduction <maximumf>, %33, %cst_17 [1] : vector<16x16xf32> to vector<16xf32>
      %35 = vector.shape_cast %34 : vector<16xf32> to vector<16x1xf32>
      %cst_18 = arith.constant -1.000000e+29 : f32
      %36 = vector.broadcast %cst_18 : f32 to vector<16x16xf32>
      %37 = arith.cmpf ogt, %33, %36 : vector<16x16xf32>
      %38 = vector.broadcast %35 : vector<16x1xf32> to vector<16x16xf32>
      %39 = arith.subf %33, %38 : vector<16x16xf32>
      %40 = math.exp %39 : vector<16x16xf32>
      %cst_19 = arith.constant 0.000000e+00 : f32
      %41 = vector.broadcast %cst_19 : f32 to vector<16x16xf32>
      %42 = arith.select %37, %40, %41 : vector<16x16xi1>, vector<16x16xf32>
      %cst_20 = arith.constant dense<0.000000e+00> : vector<16xf32>
      %43 = vector.multi_reduction <add>, %42, %cst_20 [1] : vector<16x16xf32> to vector<16xf32>
      %44 = vector.shape_cast %43 : vector<16xf32> to vector<16x1xf32>
      %45 = vector.broadcast %22 : f32 to vector<16x1xf32>
      %46 = arith.mulf %45, %44 : vector<16x1xf32>
      %47 = vector.broadcast %46 : vector<16x1xf32> to vector<16x16xf32>
      %48 = arith.cmpf ogt, %42, %47 : vector<16x16xf32>
      %cst_21 = arith.constant 1.000000e+00 : f32
      %cst_22 = arith.constant 0.000000e+00 : f32
      %49 = vector.broadcast %cst_21 : f32 to vector<16x16xf32>
      %50 = vector.broadcast %cst_22 : f32 to vector<16x16xf32>
      %51 = arith.select %48, %49, %50 : vector<16x16xi1>, vector<16x16xf32>
      %c0_23 = arith.constant 0 : index
      %c0_24 = arith.constant 0 : index
      %c0_25 = arith.constant 0 : index
      %52 = vector.load %arg9[%c0_23, %c0_24, %c0_25] : memref<1x16x16xf32, #tpu.memory_space<vmem>>, vector<1x16x16xf32>
      %53 = vector.shape_cast %52 : vector<1x16x16xf32> to vector<16x16xf32>
      %54 = vector.shape_cast %51 : vector<16x16xf32> to vector<1x16x16xf32>
      tpu.vector_store %arg9[%c0_23, %c0_24, %c0_25], %54 {strides = array<i32>} : memref<1x16x16xf32, #tpu.memory_space<vmem>>, vector<1x16x16xf32>,
    } else {
    }
    return
  }
  func.func @transform_0(%arg0: i32, %arg1: i32) -> i32 {
    %c0_i32 = arith.constant 0 : i32
    %c0_i32_0 = arith.constant 0 : i32
    return %c0_i32 : i32
  }
  func.func @transform_1(%arg0: i32, %arg1: i32) -> i32 {
    %c0_i32 = arith.constant 0 : i32
    %c0_i32_0 = arith.constant 0 : i32
    return %c0_i32 : i32
  }
  func.func @transform_2(%arg0: i32, %arg1: i32) -> (i32, i32, i32) {
    %c0_i32 = arith.constant 0 : i32
    %c0_i32_0 = arith.constant 0 : i32
    return %arg0, %arg1, %c0_i32 : i32, i32, i32
  }
  func.func @transform_3(%arg0: i32, %arg1: i32) -> (i32, i32, i32) {
    %c0_i32 = arith.constant 0 : i32
    %c0_i32_0 = arith.constant 0 : i32
    %c0_i32_1 = arith.constant 0 : i32
    return %arg0, %c0_i32, %c0_i32_0 : i32, i32, i32
  }
  func.func @transform_4(%arg0: i32, %arg1: i32) -> (i32, i32) {
    %c0_i32 = arith.constant 0 : i32
    %c0_i32_0 = arith.constant 0 : i32
    %c0_i32_1 = arith.constant 0 : i32
    return %c0_i32, %c0_i32_0 : i32, i32
  }
  func.func @transform_5(%arg0: i32, %arg1: i32) -> (i32, i32) {
    %c0_i32 = arith.constant 0 : i32
    %c0_i32_0 = arith.constant 0 : i32
    %c0_i32_1 = arith.constant 0 : i32
    return %c0_i32, %c0_i32_0 : i32, i32
  }
  func.func @transform_6(%arg0: i32, %arg1: i32) -> i32 {
    %c0_i32 = arith.constant 0 : i32
    %c0_i32_0 = arith.constant 0 : i32
    return %c0_i32 : i32
  }
  func.func @transform_7(%arg0: i32, %arg1: i32) -> (i32, i32, i32) {
    %c0_i32 = arith.constant 0 : i32
    %c0_i32_0 = arith.constant 0 : i32
    return %arg0, %arg1, %c0_i32 : i32, i32, i32
  }
}

</mosaic_0001>

<llo_original>
// kernel: tpu_custom_call.1
$region0: #{tpu_custom_call.1}
  #allocation0 [shape = 'u32[]', space=smem, size = 0x4, offset = 0x4, fixed_abs, tag = 'smem constant byte address 0x4 - core index']
  #allocation1 [shape = 'u32[144,128]{1,0:T(1,128)}', space=vmem, size = 0x12000, scoped, tag = 'internal scratch']
  #allocation2 [shape = 'f32[16,16]{1,0:T(8,128)}', space=vmem, size = 0x2000, scoped, tag = 'scratch operand']
  %s0 = inlined_call_operand.hbm [shape: s32[2], index: 0, kind: input, shape index: {}]
  %s1 = inlined_call_operand.vmem [shape: s32[2], index: 1, kind: input, shape index: {}]
  %s2 = inlined_call_operand.hbm [shape: f32[2,16,128], index: 2, kind: input, shape index: {}]
  %s3 = inlined_call_operand.hbm [shape: f32[2,16,128], index: 3, kind: input, shape index: {}]
  %s4 = inlined_call_operand.hbm [shape: bf16[128,128], index: 4, kind: input, shape index: {}]
  %s5 = inlined_call_operand.vmem [shape: f32[8,128], index: 5, kind: input, shape index: {}]
  %s6 = inlined_call_operand.vmem [shape: f32[4], index: 6, kind: input, shape index: {}]
  %s7 = inlined_call_operand.hbm [shape: f32[2,16,16], index: 7, kind: output, shape index: {}]
  %s8 = sld [smem:[#allocation0]]
  $region97: #{tpu_custom_call.1} parent=0
    _
  %s10 = ssub.s32 1, %s8
  %s11 = scalar_select 0, %s10, %s8
  $region1: #{tpu_custom_call.1} parent=0
    #allocation3 [shape = 'u8[512]{0}', space=smem, size = 0x200, scoped, tag = 'input window, operand 0, single buffered']
    #allocation4 [shape = 's32[2]{0}', space=sflag, size = 0x8, scoped, tag = 'scoped memory for tpu_custom_call.1']
    #allocation5 [shape = 's32[2]{0}', space=sflag, size = 0x8, scoped, tag = 'scoped memory for tpu_custom_call.1']
    #allocation6 [shape = 's32[2]{0}', space=sflag, size = 0x8, scoped, tag = 'scoped memory for tpu_custom_call.1']
    #allocation7 [shape = 's32[2]{0}', space=sflag, size = 0x8, scoped, tag = 'scoped memory for tpu_custom_call.1']
    #allocation8 [shape = 'u8[512]{0}', space=smem, size = 0x200, scoped, tag = 'input window, operand 1, single buffered']
    #allocation9 [shape = 'u8[16384]{0}', space=vmem, size = 0x4000, scoped, tag = 'input window, operand 2']
    #allocation10 [shape = 'u8[16384]{0}', space=vmem, size = 0x4000, scoped, tag = 'input window, operand 3']
    #allocation11 [shape = 's32[2]{0}', space=sflag, size = 0x8, scoped, tag = 'scoped memory for tpu_custom_call.1']
    #allocation12 [shape = 'u8[32768]{0}', space=vmem, size = 0x8000, scoped, tag = 'input window, operand 4, single buffered']
    #allocation13 [shape = 'u8[512]{0}', space=smem, size = 0x200, scoped, tag = 'input window, operand 6, single buffered']
    #allocation14 [shape = 's32[1]{0}', space=sflag, size = 0x4, scoped, tag = 'scoped memory for tpu_custom_call.1']
    #allocation15 [shape = 'u8[16384]{0}', space=vmem, size = 0x4000, scoped, tag = 'output window, operand 0']
    %12 = vsyncpa [#allocation6], 0
    %13 = vsyncpa [#allocation7], 0
    %14 = vsyncpa [#allocation4], 0
    %s15 = scalar_lea.sflag [#allocation4], 1
    %16 = vsyncpa %s15, 0
    %17 = vsyncpa [#allocation11], 0
    %s18 = scalar_lea.sflag [#allocation11], 1
    %19 = vsyncpa %s18, 0
    %20 = vsyncpa [#allocation14], 0
    %21 = vsyncpa [#allocation5], 0
    %s22 = scalar_lea.sflag [#allocation5], 1
    %23 = vsyncpa %s22, 0
    loop: start=0, step=1, limit=4
    $region2: #{tpu_custom_call.1} parent=1 // loop_pre_header
      _
    $region3: #{tpu_custom_call.1} parent=1 // loop_header
      %s25 = sphi 0, %s29
      %p26 = scmp.ge.s32.totalorder %s25, 4
      %s32 = sphi 0, %s44
      %s33 = sphi 0, %s40
      %s34 = sphi 0, %s32
      %s35 = sphi 0, %s33
      %s36 = sphi 0, %s34
      %s37 = sphi 0, %s35
      %s45 = sphi 0, %s45
      %s47 = sphi 0, %s45
      %s48 = sphi 0, %s47
      %s62 = sphi 0, %s48
      %s66 = sphi 0, %s66
      %s68 = sphi 0, %s66
      %s69 = sphi 0, %s68
      %s83 = sphi 0, %s69
      %s91 = sphi 0, %s93
      %s94 = sphi 0, %s91
      %s95 = sphi 0, %s94
      %s111 = sphi 0, %s95
      %s117 = sphi 0, %s119
      %s120 = sphi 0, %s117
      %s121 = sphi 0, %s120
      %s137 = sphi 0, %s121
      %s141 = sphi 0, %s141
      %s143 = sphi 0, %s141
      %s144 = sphi 0, %s143
      %s158 = sphi 0, %s144
      %s162 = sphi 0, %s162
      %s164 = sphi 0, %s162
      %s165 = sphi 0, %s164
      %s179 = sphi 0, %s165
      %s183 = sphi 0, %s183
      %s185 = sphi 0, %s183
      %s186 = sphi 0, %s185
      %s200 = sphi 0, %s186
      %s208 = sphi 0, %s210
      %s211 = sphi 0, %s208
      %s212 = sphi 0, %s211
      %s228 = sphi 0, %s212
    $region4: #{tpu_custom_call.1} parent=1 // loop_header_branch
      %28 = sbr.rel (%p26) target = $region8
    $region5: #{tpu_custom_call.1} parent=1 // loop_body
      %s30 = ssub.s32 %s25, 1
      %s31 = ssub.s32 %s25, 2
      %s38 = sadd.s32 1, %s33
      %p39 = scmp.ge.s32.totalorder %s38, 1
      %s40 = scalar_select %p39, 0, %s38
      %s41 = sadd.s32 1, %s32
      %s42 = scalar_select %p39, %s41, %s32
      %p43 = scmp.ge.s32.totalorder %s42, 2
      %s44 = scalar_select %p43, 0, %s42
      %s46 = sadd.s32 %s45, 1
      %p49 = scmp.eq.s32.totalorder %s25, 1
      %p50 = scmp.ne.s32.totalorder %s45, %s47
      %p51 = scmp.eq.s32.totalorder %s25, 0
      %p52 = por %p50, %p51
      %p53 = scmp.ne.s32.totalorder %s45, %s47
      %p54 = scmp.eq.s32.totalorder %s30, 1
      %p55 = por %p53, %p54
      %p56 = scmp.ne.s32.totalorder %s47, %s48
      %p57 = scmp.eq.s32.totalorder %s30, 0
      %p58 = por %p56, %p57
      %p59 = scmp.ne.s32.totalorder %s47, %s48
      %p60 = scmp.eq.s32.totalorder %s31, 1
      %p61 = por %p59, %p60
      %p63 = scmp.ne.s32.totalorder %s48, %s62
      %p64 = scmp.eq.s32.totalorder %s31, 0
      %p65 = por %p63, %p64
      %s67 = sadd.s32 %s66, 1
      %p70 = scmp.eq.s32.totalorder %s25, 1
      %p71 = scmp.ne.s32.totalorder %s66, %s68
      %p72 = scmp.eq.s32.totalorder %s25, 0
      %p73 = por %p71, %p72
      %p74 = scmp.ne.s32.totalorder %s66, %s68
      %p75 = scmp.eq.s32.totalorder %s30, 1
      %p76 = por %p74, %p75
      %p77 = scmp.ne.s32.totalorder %s68, %s69
      %p78 = scmp.eq.s32.totalorder %s30, 0
      %p79 = por %p77, %p78
      %p80 = scmp.ne.s32.totalorder %s68, %s69
      %p81 = scmp.eq.s32.totalorder %s31, 1
      %p82 = por %p80, %p81
      %p84 = scmp.ne.s32.totalorder %s69, %s83
      %p85 = scmp.eq.s32.totalorder %s31, 0
      %p86 = por %p84, %p85
      %s87 = ssub.s32 %s32, %s44
      %s88 = ssub.s32 %s33, %s40
      %s89 = sor.u32 %s87, %s88
      %p90 = scmp.eq.s32.totalorder %s89, 0
      %s92 = sadd.s32 %s91, 1
      %s93 = scalar_select %p90, %s91, %s92
      %p96 = pneg %p90
      %p97 = scmp.eq.s32.totalorder %s25, 1
      %p98 = por %p96, %p97
      %p99 = scmp.ne.s32.totalorder %s91, %s94
      %p100 = scmp.eq.s32.totalorder %s25, 0
      %p101 = por %p99, %p100
      %p102 = scmp.ne.s32.totalorder %s91, %s94
      %p103 = scmp.eq.s32.totalorder %s30, 1
      %p104 = por %p102, %p103
      %p105 = scmp.ne.s32.totalorder %s94, %s95
      %p106 = scmp.eq.s32.totalorder %s30, 0
      %p107 = por %p105, %p106
      %p108 = scmp.ne.s32.totalorder %s94, %s95
      %p109 = scmp.eq.s32.totalorder %s31, 1
      %p110 = por %p108, %p109
      %p112 = scmp.ne.s32.totalorder %s95, %s111
      %p113 = scmp.eq.s32.totalorder %s31, 0
      %p114 = por %p112, %p113
      %s115 = ssub.s32 %s32, %s44
      %p116 = scmp.eq.s32.totalorder %s115, 0
      %s118 = sadd.s32 %s117, 1
      %s119 = scalar_select %p116, %s117, %s118
      %p122 = pneg %p116
      %p123 = scmp.eq.s32.totalorder %s25, 1
      %p124 = por %p122, %p123
      %p125 = scmp.ne.s32.totalorder %s117, %s120
      %p126 = scmp.eq.s32.totalorder %s25, 0
      %p127 = por %p125, %p126
      %p128 = scmp.ne.s32.totalorder %s117, %s120
      %p129 = scmp.eq.s32.totalorder %s30, 1
      %p130 = por %p128, %p129
      %p131 = scmp.ne.s32.totalorder %s120, %s121
      %p132 = scmp.eq.s32.totalorder %s30, 0
      %p133 = por %p131, %p132
      %p134 = scmp.ne.s32.totalorder %s120, %s121
      %p135 = scmp.eq.s32.totalorder %s31, 1
      %p136 = por %p134, %p135
      %p138 = scmp.ne.s32.totalorder %s121, %s137
      %p139 = scmp.eq.s32.totalorder %s31, 0
      %p140 = por %p138, %p139
      %s142 = sadd.s32 %s141, 1
      %p145 = scmp.eq.s32.totalorder %s25, 1
      %p146 = scmp.ne.s32.totalorder %s141, %s143
      %p147 = scmp.eq.s32.totalorder %s25, 0
      %p148 = por %p146, %p147
      %p149 = scmp.ne.s32.totalorder %s141, %s143
      %p150 = scmp.eq.s32.totalorder %s30, 1
      %p151 = por %p149, %p150
      %p152 = scmp.ne.s32.totalorder %s143, %s144
      %p153 = scmp.eq.s32.totalorder %s30, 0
      %p154 = por %p152, %p153
      %p155 = scmp.ne.s32.totalorder %s143, %s144
      %p156 = scmp.eq.s32.totalorder %s31, 1
      %p157 = por %p155, %p156
      %p159 = scmp.ne.s32.totalorder %s144, %s158
      %p160 = scmp.eq.s32.totalorder %s31, 0
      %p161 = por %p159, %p160
      %s163 = sadd.s32 %s162, 1
      %p166 = scmp.eq.s32.totalorder %s25, 1
      %p167 = scmp.ne.s32.totalorder %s162, %s164
      %p168 = scmp.eq.s32.totalorder %s25, 0
      %p169 = por %p167, %p168
      %p170 = scmp.ne.s32.totalorder %s162, %s164
      %p171 = scmp.eq.s32.totalorder %s30, 1
      %p172 = por %p170, %p171
      %p173 = scmp.ne.s32.totalorder %s164, %s165
      %p174 = scmp.eq.s32.totalorder %s30, 0
      %p175 = por %p173, %p174
      %p176 = scmp.ne.s32.totalorder %s164, %s165
      %p177 = scmp.eq.s32.totalorder %s31, 1
      %p178 = por %p176, %p177
      %p180 = scmp.ne.s32.totalorder %s165, %s179
      %p181 = scmp.eq.s32.totalorder %s31, 0
      %p182 = por %p180, %p181
      %s184 = sadd.s32 %s183, 1
      %p187 = scmp.eq.s32.totalorder %s25, 1
      %p188 = scmp.ne.s32.totalorder %s183, %s185
      %p189 = scmp.eq.s32.totalorder %s25, 0
      %p190 = por %p188, %p189
      %p191 = scmp.ne.s32.totalorder %s183, %s185
      %p192 = scmp.eq.s32.totalorder %s30, 1
      %p193 = por %p191, %p192
      %p194 = scmp.ne.s32.totalorder %s185, %s186
      %p195 = scmp.eq.s32.totalorder %s30, 0
      %p196 = por %p194, %p195
      %p197 = scmp.ne.s32.totalorder %s185, %s186
      %p198 = scmp.eq.s32.totalorder %s31, 1
      %p199 = por %p197, %p198
      %p201 = scmp.ne.s32.totalorder %s186, %s200
      %p202 = scmp.eq.s32.totalorder %s31, 0
      %p203 = por %p201, %p202
      %s204 = ssub.s32 %s32, %s44
      %s205 = ssub.s32 %s33, %s40
      %s206 = sor.u32 %s204, %s205
      %p207 = scmp.eq.s32.totalorder %s206, 0
      %s209 = sadd.s32 %s208, 1
      %s210 = scalar_select %p207, %s208, %s209
      %p213 = pneg %p207
      %p214 = scmp.eq.s32.totalorder %s25, 1
      %p215 = por %p213, %p214
      %p216 = scmp.ne.s32.totalorder %s208, %s211
      %p217 = scmp.eq.s32.totalorder %s25, 0
      %p218 = por %p216, %p217
      %p219 = scmp.ne.s32.totalorder %s208, %s211
      %p220 = scmp.eq.s32.totalorder %s30, 1
      %p221 = por %p219, %p220
      %p222 = scmp.ne.s32.totalorder %s211, %s212
      %p223 = scmp.eq.s32.totalorder %s30, 0
      %p224 = por %p222, %p223
      %p225 = scmp.ne.s32.totalorder %s211, %s212
      %p226 = scmp.eq.s32.totalorder %s31, 1
      %p227 = por %p225, %p226
      %p229 = scmp.ne.s32.totalorder %s212, %s228
      %p230 = scmp.eq.s32.totalorder %s31, 0
      %p231 = por %p229, %p230
      %p232 = scmp.le.s32.totalorder 1, %s25
      %p233 = scmp.lt.s32.totalorder %s25, 3
      %p234 = pnand %p232, %p233
      %p235 = pneg %p234
      // Predicated region
      $region9: #{tpu_custom_call.1} parent=5 // pred_check
        _
      $region10: #{tpu_custom_call.1} parent=5 // pred_check_branch
        %237 = sbr.rel (%p234) target = $region12
      $region11: #{tpu_custom_call.1} parent=5 // pred_region
        %s238 = ssub.s32 %s25, 1
        // Predicated region
        $region13: #{tpu_custom_call.1} parent=11 // pred_check
          %p239 = pneg %p58
        $region14: #{tpu_custom_call.1} parent=11 // pred_check_branch
          %241 = sbr.rel (%p239) target = $region16
        $region15: #{tpu_custom_call.1} parent=11 // pred_region
          %s243 = ssub.s32 16, 16
          %244 = vsyncadd [#allocation6], %s243
          %247 = dma.hbm_to_smem %s0, 16, [#allocation3], [#allocation6]
        $region16: #{tpu_custom_call.1} parent=11 // pred_fallthru
          _
        // Predicated region
        $region17: #{tpu_custom_call.1} parent=11 // pred_check
          %p248 = pneg %p79
        $region18: #{tpu_custom_call.1} parent=11 // pred_check_branch
          %250 = sbr.rel (%p248) target = $region20
        $region19: #{tpu_custom_call.1} parent=11 // pred_region
          %s252 = ssub.s32 16, 16
          %253 = vsyncadd [#allocation7], %s252
          %s255 = sshll.u32 %s1, 4
          %s256 = int_to_ptr.vmem [resolvable:$true] %s255
          %258 = dma.vmem_to_smem %s256, 16, [#allocation8], [#allocation7]
        $region20: #{tpu_custom_call.1} parent=11 // pred_fallthru
          _
        // Predicated region
        $region21: #{tpu_custom_call.1} parent=11 // pred_check
          %p259 = pneg %p154
        $region22: #{tpu_custom_call.1} parent=11 // pred_check_branch
          %261 = sbr.rel (%p259) target = $region24
        $region23: #{tpu_custom_call.1} parent=11 // pred_region
          %s263 = ssub.s32 1024, 1024
          %264 = vsyncadd [#allocation11], %s263
          %s265 = sshll.u32 [#allocation12], 4
          %s266 = int_to_ptr.vmem [resolvable:$true] %s265
          %271 = dma.hbm_to_vmem [thread:$0]  %s4, 1024, %s266, [#allocation11], 64, 64, 4
        $region24: #{tpu_custom_call.1} parent=11 // pred_fallthru
          _
        // Predicated region
        $region25: #{tpu_custom_call.1} parent=11 // pred_check
          %p272 = pneg %p175
        $region26: #{tpu_custom_call.1} parent=11 // pred_check_branch
          %274 = sbr.rel (%p272) target = $region28
        $region27: #{tpu_custom_call.1} parent=11 // pred_region
          _
        $region28: #{tpu_custom_call.1} parent=11 // pred_fallthru
          _
        // Predicated region
        $region29: #{tpu_custom_call.1} parent=11 // pred_check
          %p275 = pneg %p196
        $region30: #{tpu_custom_call.1} parent=11 // pred_check_branch
          %277 = sbr.rel (%p275) target = $region32
        $region31: #{tpu_custom_call.1} parent=11 // pred_region
          %s279 = ssub.s32 16, 16
          %280 = vsyncadd [#allocation14], %s279
          %s282 = sshll.u32 %s6, 4
          %s283 = int_to_ptr.vmem [resolvable:$true] %s282
          %285 = dma.vmem_to_smem %s283, 16, [#allocation13], [#allocation14]
        $region32: #{tpu_custom_call.1} parent=11 // pred_fallthru
          _
      $region12: #{tpu_custom_call.1} parent=5 // pred_fallthru
        _
      %p286 = scmp.lt.s32.totalorder %s25, 2
      // Predicated region
      $region33: #{tpu_custom_call.1} parent=5 // pred_check
        %p287 = pneg %p286
      $region34: #{tpu_custom_call.1} parent=5 // pred_check_branch
        %289 = sbr.rel (%p287) target = $region36
      $region35: #{tpu_custom_call.1} parent=5 // pred_region
        // Predicated region
        $region37: #{tpu_custom_call.1} parent=35 // pred_check
          %p290 = pneg %p101
        $region38: #{tpu_custom_call.1} parent=35 // pred_check_branch
          %292 = sbr.rel (%p290) target = $region40
        $region39: #{tpu_custom_call.1} parent=35 // pred_region
          %s293 = sand.u32 %s91, 1
          %s294 = scalar_lea.sflag [#allocation4], %s293
          %s295 = sand.u32 %s91, 1
          %s296 = smul.addr %s295, 16
          %s297 = scalar_lea.vmem [#allocation9], %s296
          %s298 = smul.u32 2, %s33
          %s300 = ssub.s32 256, 256
          %301 = vsyncadd %s294, %s300
          %s302 = smul.addr %s32, 2
          %s303 = sadd.s32 %s298, %s302
          %s304 = smul.addr %s303, 128
          %s305 = scalar_lea.hbm %s2, %s304
          %s306 = sshll.u32 %s297, 4
          %s307 = int_to_ptr.vmem [resolvable:$true] %s306
          %312 = dma.hbm_to_vmem [thread:$0]  %s305, 256, %s307, %s294, 128, 128, 8
        $region40: #{tpu_custom_call.1} parent=35 // pred_fallthru
          _
        // Predicated region
        $region41: #{tpu_custom_call.1} parent=35 // pred_check
          %p313 = pneg %p127
        $region42: #{tpu_custom_call.1} parent=35 // pred_check_branch
          %315 = sbr.rel (%p313) target = $region44
        $region43: #{tpu_custom_call.1} parent=35 // pred_region
          %s316 = sand.u32 %s25, 1
          %s317 = scalar_lea.sflag [#allocation11], %s316
          %s318 = sand.u32 %s117, 1
          %s319 = smul.addr %s318, 16
          %s320 = scalar_lea.vmem [#allocation10], %s319
          %s322 = ssub.s32 256, 256
          %323 = vsyncadd %s317, %s322
          %s324 = smul.addr %s32, 2
          %s325 = smul.addr %s324, 128
          %s326 = scalar_lea.hbm %s3, %s325
          %s327 = sshll.u32 %s320, 4
          %s328 = int_to_ptr.vmem [resolvable:$true] %s327
          %333 = dma.hbm_to_vmem [thread:$0]  %s326, 256, %s328, %s317, 128, 128, 8
        $region44: #{tpu_custom_call.1} parent=35 // pred_fallthru
          _
      $region36: #{tpu_custom_call.1} parent=5 // pred_fallthru
        _
      %p334 = scmp.le.s32.totalorder 1, %s25
      %p335 = scmp.lt.s32.totalorder %s25, 3
      %p336 = pnand %p334, %p335
      %p337 = pneg %p336
      // Predicated region
      $region45: #{tpu_custom_call.1} parent=5 // pred_check
        _
      $region46: #{tpu_custom_call.1} parent=5 // pred_check_branch
        %339 = sbr.rel (%p336) target = $region48
      $region47: #{tpu_custom_call.1} parent=5 // pred_region
        %s340 = ssub.s32 %s25, 1
        // Predicated region
        $region49: #{tpu_custom_call.1} parent=47 // pred_check
          %p341 = pneg %p58
        $region50: #{tpu_custom_call.1} parent=47 // pred_check_branch
          %343 = sbr.rel (%p341) target = $region52
        $region51: #{tpu_custom_call.1} parent=47 // pred_region
          %344 = dma.done [#allocation6], 16
        $region52: #{tpu_custom_call.1} parent=47 // pred_fallthru
          _
        // Predicated region
        $region53: #{tpu_custom_call.1} parent=47 // pred_check
          %p345 = pneg %p79
        $region54: #{tpu_custom_call.1} parent=47 // pred_check_branch
          %347 = sbr.rel (%p345) target = $region56
        $region55: #{tpu_custom_call.1} parent=47 // pred_region
          %348 = dma.done [#allocation7], 16
        $region56: #{tpu_custom_call.1} parent=47 // pred_fallthru
          _
        %s349 = sand.u32 %s94, 1
        %s350 = scalar_lea.sflag [#allocation4], %s349
        %s351 = sand.u32 %s94, 1
        %s352 = smul.addr %s351, 16
        %s353 = scalar_lea.vmem [#allocation9], %s352
        // Predicated region
        $region57: #{tpu_custom_call.1} parent=47 // pred_check
          %p354 = pneg %p107
        $region58: #{tpu_custom_call.1} parent=47 // pred_check_branch
          %356 = sbr.rel (%p354) target = $region60
        $region59: #{tpu_custom_call.1} parent=47 // pred_region
          %357 = dma.done %s350, 256
        $region60: #{tpu_custom_call.1} parent=47 // pred_fallthru
          _
        %s358 = sand.u32 %s30, 1
        %s359 = scalar_lea.sflag [#allocation11], %s358
        %s360 = sand.u32 %s120, 1
        %s361 = smul.addr %s360, 16
        %s362 = scalar_lea.vmem [#allocation10], %s361
        // Predicated region
        $region61: #{tpu_custom_call.1} parent=47 // pred_check
          %p363 = pneg %p133
        $region62: #{tpu_custom_call.1} parent=47 // pred_check_branch
          %365 = sbr.rel (%p363) target = $region64
        $region63: #{tpu_custom_call.1} parent=47 // pred_region
          %366 = dma.done %s359, 256
        $region64: #{tpu_custom_call.1} parent=47 // pred_fallthru
          _
        // Predicated region
        $region65: #{tpu_custom_call.1} parent=47 // pred_check
          %p367 = pneg %p154
        $region66: #{tpu_custom_call.1} parent=47 // pred_check_branch
          %369 = sbr.rel (%p367) target = $region68
        $region67: #{tpu_custom_call.1} parent=47 // pred_region
          %370 = dma.done [#allocation11], 1024
        $region68: #{tpu_custom_call.1} parent=47 // pred_fallthru
          _
        // Predicated region
        $region69: #{tpu_custom_call.1} parent=47 // pred_check
          %p371 = pneg %p196
        $region70: #{tpu_custom_call.1} parent=47 // pred_check_branch
          %373 = sbr.rel (%p371) target = $region72
        $region71: #{tpu_custom_call.1} parent=47 // pred_region
          %374 = dma.done [#allocation14], 16
        $region72: #{tpu_custom_call.1} parent=47 // pred_fallthru
          _
        %375 = sfence
        %p376 = pneg %p58
        %p377 = pneg %p55
        %p378 = pneg %p79
        %p379 = pneg %p76
        %s380 = sand.u32 %s94, 1
        %s381 = scalar_lea.sflag [#allocation4], %s380
        %s382 = sand.u32 %s94, 1
        %s383 = smul.addr %s382, 16
        %s384 = scalar_lea.vmem [#allocation9], %s383
        %p385 = pneg %p107
        %p386 = pneg %p104
        %s387 = sand.u32 %s30, 1
        %s388 = scalar_lea.sflag [#allocation11], %s387
        %s389 = sand.u32 %s120, 1
        %s390 = smul.addr %s389, 16
        %s391 = scalar_lea.vmem [#allocation10], %s390
        %p392 = pneg %p133
        %p393 = pneg %p130
        %p394 = pneg %p154
        %p395 = pneg %p151
        %p396 = pneg %p175
        %p397 = pneg %p172
        %p398 = pneg %p196
        %p399 = pneg %p193
        %p400 = pneg %p224
        %p401 = pneg %p221
        %s402 = sand.u32 %s211, 1
        %s403 = scalar_lea.sflag [#allocation5], %s402
        %s404 = sand.u32 %s211, 1
        %s405 = smul.addr %s404, 16
        %s406 = scalar_lea.vmem [#allocation15], %s405
        %s407 = smul.u32 2, %s35
        %s408 = smul.u32 2, %s35
        %s410 = smul.u32 %s35, 16
        %s411 = sld [smem:[#allocation3 + %s34]]
        %s412 = sld [smem:[#allocation8 + %s34]]
        %p413 = scmp.gt.s32.totalorder %s410, %s411
        %s414 = scalar_select %p413, %s410, %s411
        %p415 = scmp.gt.s32.totalorder %s414, 1
        %s416 = scalar_select %p415, %s414, 1
        %s417 = sadd.s32 %s410, 16
        %s418 = sadd.s32 %s411, %s412
        %p419 = scmp.lt.s32.totalorder %s417, %s418
        %s420 = scalar_select %p419, %s417, %s418
        %p421 = scmp.lt.s32.totalorder %s416, %s420
        %p422 = scmp.ge.s32.totalorder %s416, %s420
        // Predicated region
        $region73: #{tpu_custom_call.1} parent=47 // pred_check
          %p423 = pneg %p422
        $region74: #{tpu_custom_call.1} parent=47 // pred_check_branch
          %425 = sbr.rel (%p423) target = $region76
        $region75: #{tpu_custom_call.1} parent=47 // pred_region
          %vm426 = vcmask 130048
          %427 = vst.msk [vmem:[%s406] sm:$0xff] %vm426, 0.0
          %428 = vst.msk [vmem:[%s406 + $0x8] sm:$0xff] %vm426, 0.0
        $region76: #{tpu_custom_call.1} parent=47 // pred_fallthru
          _
        // Predicated region
        $region77: #{tpu_custom_call.1} parent=47 // pred_check
          %p429 = pneg %p421
        $region78: #{tpu_custom_call.1} parent=47 // pred_check_branch
          %431 = sbr.rel (%p429) target = $region80
        $region79: #{tpu_custom_call.1} parent=47 // pred_region
          %v432 = vld [vmem:[%s5] sm:$0xff]
          %s433 = sld [smem:[#allocation13]]
          %s434 = sld [smem:[#allocation13 + $0x1]]
          %s435 = sld [smem:[#allocation13 + $0x2]]
          %s436 = sld [smem:[#allocation13 + $0x3]]
          %v437 = vld [vmem:[%s353] sm:$0xff]
          %v438 = vld [vmem:[%s353 + $0x8] sm:$0xff]
          %v439 = vld [vmem:[#allocation12] sm:$0xf]
          %v440 = vld [vmem:[#allocation12 + $0x4] sm:$0xf]
          %v441 = vld [vmem:[#allocation12 + $0x8] sm:$0xf]
          %v442 = vld [vmem:[#allocation12 + $0xc] sm:$0xf]
          %v443 = vld [vmem:[#allocation12 + $0x10] sm:$0xf]
          %v444 = vld [vmem:[#allocation12 + $0x14] sm:$0xf]
          %v445 = vld [vmem:[#allocation12 + $0x18] sm:$0xf]
          %v446 = vld [vmem:[#allocation12 + $0x1c] sm:$0xf]
          %v447 = vld [vmem:[#allocation12 + $0x20] sm:$0xf]
          %v448 = vld [vmem:[#allocation12 + $0x24] sm:$0xf]
          %v449 = vld [vmem:[#allocation12 + $0x28] sm:$0xf]
          %v450 = vld [vmem:[#allocation12 + $0x2c] sm:$0xf]
          %v451 = vld [vmem:[#allocation12 + $0x30] sm:$0xf]
          %v452 = vld [vmem:[#allocation12 + $0x34] sm:$0xf]
          %v453 = vld [vmem:[#allocation12 + $0x38] sm:$0xf]
          %v454 = vld [vmem:[#allocation12 + $0x3c] sm:$0xf]
          %vm455 = vcmask 130048
          %456 = vst.msk [vmem:[#allocation2] sm:$0xff] %vm455, -1e+30
          %457 = vst.msk [vmem:[#allocation2 + $0x8] sm:$0xff] %vm455, -1e+30
          %p458 = scmp.gt.s32.totalorder %s420, 0
          // Predicated region
          $region81: #{tpu_custom_call.1} parent=79 // pred_check
            %p459 = pneg %p458
          $region82: #{tpu_custom_call.1} parent=79 // pred_check_branch
            %461 = sbr.rel (%p459) target = $region84
          $region83: #{tpu_custom_call.1} parent=79 // pred_region
            %v462 = vld [vmem:[%s362] sm:$0xff]
            %v463 = vld [vmem:[%s362 + $0x8] sm:$0xff]
            %v466 = vcombine.high %v437, %v437
            %v468 = vunpack.c.l.s4 1966171168
            %v469 = vunpack.c.0.s8 %v468
            %v470 = vlaneseq
            %v471 = vshrl.u32 %v470, 7
            %v472 = vsub.s32 %v469, %v471
            %v473 = vrot.slane %v437, %v472
            %v475 = vunpack.c.l.s4 1966171168
            %v476 = vunpack.c.0.s8 %v475
            %v477 = vlaneseq
            %v478 = vshrl.u32 %v477, 7
            %v479 = vsub.s32 %v476, %v478
            %v480 = vrot.slane %v466, %v479
            %v481 = vcombine.high %v473, %v473
            %v482 = vcombine.high %v480, %v480
            %v484 = vunpack.c.l.s4 1966171168
            %v485 = vunpack.c.0.s8 %v484
            %v486 = vlaneseq
            %v487 = vshrl.u32 %v486, 7
            %v488 = vsub.s32 %v485, %v487
            %v489 = vrot.slane %v473, %v488
            %v491 = vunpack.c.l.s4 1966171168
            %v492 = vunpack.c.0.s8 %v491
            %v493 = vlaneseq
            %v494 = vshrl.u32 %v493, 7
            %v495 = vsub.s32 %v492, %v494
            %v496 = vrot.slane %v480, %v495
            %v498 = vunpack.c.l.s4 1966171168
            %v499 = vunpack.c.0.s8 %v498
            %v500 = vlaneseq
            %v501 = vshrl.u32 %v500, 7
            %v502 = vsub.s32 %v499, %v501
            %v503 = vrot.slane %v481, %v502
            %v505 = vunpack.c.l.s4 1966171168
            %v506 = vunpack.c.0.s8 %v505
            %v507 = vlaneseq
            %v508 = vshrl.u32 %v507, 7
            %v509 = vsub.s32 %v506, %v508
            %v510 = vrot.slane %v482, %v509
            %v511 = vcombine.high %v489, %v489
            %v512 = vcombine.high %v496, %v496
            %v513 = vcombine.high %v503, %v503
            %v514 = vcombine.high %v510, %v510
            %v515 = vcombine.high %v438, %v438
            %v517 = vunpack.c.l.s4 1966171168
            %v518 = vunpack.c.0.s8 %v517
            %v519 = vlaneseq
            %v520 = vshrl.u32 %v519, 7
            %v521 = vsub.s32 %v518, %v520
            %v522 = vrot.slane %v438, %v521
            %v524 = vunpack.c.l.s4 1966171168
            %v525 = vunpack.c.0.s8 %v524
            %v526 = vlaneseq
            %v527 = vshrl.u32 %v526, 7
            %v528 = vsub.s32 %v525, %v527
            %v529 = vrot.slane %v515, %v528
            %v530 = vcombine.high %v522, %v522
            %v531 = vcombine.high %v529, %v529
            %v533 = vunpack.c.l.s4 1966171168
            %v534 = vunpack.c.0.s8 %v533
            %v535 = vlaneseq
            %v536 = vshrl.u32 %v535, 7
            %v537 = vsub.s32 %v534, %v536
            %v538 = vrot.slane %v522, %v537
            %v540 = vunpack.c.l.s4 1966171168
            %v541 = vunpack.c.0.s8 %v540
            %v542 = vlaneseq
            %v543 = vshrl.u32 %v542, 7
            %v544 = vsub.s32 %v541, %v543
            %v545 = vrot.slane %v529, %v544
            %v547 = vunpack.c.l.s4 1966171168
            %v548 = vunpack.c.0.s8 %v547
            %v549 = vlaneseq
            %v550 = vshrl.u32 %v549, 7
            %v551 = vsub.s32 %v548, %v550
            %v552 = vrot.slane %v530, %v551
            %v554 = vunpack.c.l.s4 1966171168
            %v555 = vunpack.c.0.s8 %v554
            %v556 = vlaneseq
            %v557 = vshrl.u32 %v556, 7
            %v558 = vsub.s32 %v555, %v557
            %v559 = vrot.slane %v531, %v558
            %v560 = vcombine.high %v538, %v538
            %v561 = vcombine.high %v545, %v545
            %v562 = vcombine.high %v552, %v552
            %v563 = vcombine.high %v559, %v559
            %v564 = vlaneseq
            %v565 = vshrl.u32 %v564, 7
            %v566 = vsub.s32 0, %v565
            %v567 = vrot.slane %v489, %v566
            %v568 = vlaneseq
            %v569 = vshrl.u32 %v568, 7
            %v570 = vsub.s32 0, %v569
            %v571 = vrot.slane %v503, %v570
            %v572 = vlaneseq
            %v573 = vshrl.u32 %v572, 7
            %v574 = vsub.s32 0, %v573
            %v575 = vrot.slane %v511, %v574
            %v576 = vlaneseq
            %v577 = vshrl.u32 %v576, 7
            %v578 = vsub.s32 0, %v577
            %v579 = vrot.slane %v513, %v578
            %v580 = vlaneseq
            %v581 = vshrl.u32 %v580, 7
            %v582 = vsub.s32 0, %v581
            %v583 = vrot.slane %v496, %v582
            %v584 = vlaneseq
            %v585 = vshrl.u32 %v584, 7
            %v586 = vsub.s32 0, %v585
            %v587 = vrot.slane %v510, %v586
            %v588 = vlaneseq
            %v589 = vshrl.u32 %v588, 7
            %v590 = vsub.s32 0, %v589
            %v591 = vrot.slane %v512, %v590
            %v592 = vlaneseq
            %v593 = vshrl.u32 %v592, 7
            %v594 = vsub.s32 0, %v593
            %v595 = vrot.slane %v514, %v594
            %v596 = vlaneseq
            %v597 = vshrl.u32 %v596, 7
            %v598 = vsub.s32 0, %v597
            %v599 = vrot.slane %v538, %v598
            %v600 = vlaneseq
            %v601 = vshrl.u32 %v600, 7
            %v602 = vsub.s32 0, %v601
            %v603 = vrot.slane %v552, %v602
            %v604 = vlaneseq
            %v605 = vshrl.u32 %v604, 7
            %v606 = vsub.s32 0, %v605
            %v607 = vrot.slane %v560, %v606
            %v608 = vlaneseq
            %v609 = vshrl.u32 %v608, 7
            %v610 = vsub.s32 0, %v609
            %v611 = vrot.slane %v562, %v610
            %v612 = vlaneseq
            %v613 = vshrl.u32 %v612, 7
            %v614 = vsub.s32 0, %v613
            %v615 = vrot.slane %v545, %v614
            %v616 = vlaneseq
            %v617 = vshrl.u32 %v616, 7
            %v618 = vsub.s32 0, %v617
            %v619 = vrot.slane %v559, %v618
            %v620 = vlaneseq
            %v621 = vshrl.u32 %v620, 7
            %v622 = vsub.s32 0, %v621
            %v623 = vrot.slane %v561, %v622
            %v624 = vlaneseq
            %v625 = vshrl.u32 %v624, 7
            %v626 = vsub.s32 0, %v625
            %v627 = vrot.slane %v563, %v626
            %v644 = vadd.f32 %v567, %v462
            %v645 = vadd.f32 %v567, %v463
            %v646 = vadd.f32 %v571, %v462
            %v647 = vadd.f32 %v571, %v463
            %v648 = vadd.f32 %v575, %v462
            %v649 = vadd.f32 %v575, %v463
            %v650 = vadd.f32 %v579, %v462
            %v651 = vadd.f32 %v579, %v463
            %v652 = vadd.f32 %v583, %v462
            %v653 = vadd.f32 %v583, %v463
            %v654 = vadd.f32 %v587, %v462
            %v655 = vadd.f32 %v587, %v463
            %v656 = vadd.f32 %v591, %v462
            %v657 = vadd.f32 %v591, %v463
            %v658 = vadd.f32 %v595, %v462
            %v659 = vadd.f32 %v595, %v463
            %v660 = vadd.f32 %v599, %v462
            %v661 = vadd.f32 %v599, %v463
            %v662 = vadd.f32 %v603, %v462
            %v663 = vadd.f32 %v603, %v463
            %v664 = vadd.f32 %v607, %v462
            %v665 = vadd.f32 %v607, %v463
            %v666 = vadd.f32 %v611, %v462
            %v667 = vadd.f32 %v611, %v463
            %v668 = vadd.f32 %v615, %v462
            %v669 = vadd.f32 %v615, %v463
            %v670 = vadd.f32 %v619, %v462
            %v671 = vadd.f32 %v619, %v463
            %v672 = vadd.f32 %v623, %v462
            %v673 = vadd.f32 %v623, %v463
            %v674 = vadd.f32 %v627, %v462
            %v675 = vadd.f32 %v627, %v463
            %v676 = vmax.f32 %v644, 0.0
            %v677 = vmax.f32 %v645, 0.0
            %v678 = vmax.f32 %v646, 0.0
            %v679 = vmax.f32 %v647, 0.0
            %v680 = vmax.f32 %v648, 0.0
            %v681 = vmax.f32 %v649, 0.0
            %v682 = vmax.f32 %v650, 0.0
            %v683 = vmax.f32 %v651, 0.0
            %v684 = vmax.f32 %v652, 0.0
            %v685 = vmax.f32 %v653, 0.0
            %v686 = vmax.f32 %v654, 0.0
            %v687 = vmax.f32 %v655, 0.0
            %v688 = vmax.f32 %v656, 0.0
            %v689 = vmax.f32 %v657, 0.0
            %v690 = vmax.f32 %v658, 0.0
            %v691 = vmax.f32 %v659, 0.0
            %v692 = vmax.f32 %v660, 0.0
            %v693 = vmax.f32 %v661, 0.0
            %v694 = vmax.f32 %v662, 0.0
            %v695 = vmax.f32 %v663, 0.0
            %v696 = vmax.f32 %v664, 0.0
            %v697 = vmax.f32 %v665, 0.0
            %v698 = vmax.f32 %v666, 0.0
            %v699 = vmax.f32 %v667, 0.0
            %v700 = vmax.f32 %v668, 0.0
            %v701 = vmax.f32 %v669, 0.0
            %v702 = vmax.f32 %v670, 0.0
            %v703 = vmax.f32 %v671, 0.0
            %v704 = vmax.f32 %v672, 0.0
            %v705 = vmax.f32 %v673, 0.0
            %v706 = vmax.f32 %v674, 0.0
            %v707 = vmax.f32 %v675, 0.0
            %708 = vadd.xlane.f32.xlu0 %v676
            %v709 = vpop.xlane.xlu0 %708
            %710 = vadd.xlane.f32.xlu0 %v677
            %v711 = vpop.xlane.xlu0 %710
            %712 = vadd.xlane.f32.xlu0 %v678
            %v713 = vpop.xlane.xlu0 %712
            %714 = vadd.xlane.f32.xlu0 %v679
            %v715 = vpop.xlane.xlu0 %714
            %716 = vadd.xlane.f32.xlu0 %v680
            %v717 = vpop.xlane.xlu0 %716
            %718 = vadd.xlane.f32.xlu0 %v681
            %v719 = vpop.xlane.xlu0 %718
            %720 = vadd.xlane.f32.xlu0 %v682
            %v721 = vpop.xlane.xlu0 %720
            %722 = vadd.xlane.f32.xlu0 %v683
            %v723 = vpop.xlane.xlu0 %722
            %724 = vadd.xlane.f32.xlu0 %v684
            %v725 = vpop.xlane.xlu0 %724
            %726 = vadd.xlane.f32.xlu0 %v685
            %v727 = vpop.xlane.xlu0 %726
            %728 = vadd.xlane.f32.xlu0 %v686
            %v729 = vpop.xlane.xlu0 %728
            %730 = vadd.xlane.f32.xlu0 %v687
            %v731 = vpop.xlane.xlu0 %730
            %732 = vadd.xlane.f32.xlu0 %v688
            %v733 = vpop.xlane.xlu0 %732
            %734 = vadd.xlane.f32.xlu0 %v689
            %v735 = vpop.xlane.xlu0 %734
            %736 = vadd.xlane.f32.xlu0 %v690
            %v737 = vpop.xlane.xlu0 %736
            %738 = vadd.xlane.f32.xlu0 %v691
            %v739 = vpop.xlane.xlu0 %738
            %740 = vadd.xlane.f32.xlu0 %v692
            %v741 = vpop.xlane.xlu0 %740
            %742 = vadd.xlane.f32.xlu0 %v693
            %v743 = vpop.xlane.xlu0 %742
            %744 = vadd.xlane.f32.xlu0 %v694
            %v745 = vpop.xlane.xlu0 %744
            %746 = vadd.xlane.f32.xlu0 %v695
            %v747 = vpop.xlane.xlu0 %746
            %748 = vadd.xlane.f32.xlu0 %v696
            %v749 = vpop.xlane.xlu0 %748
            %750 = vadd.xlane.f32.xlu0 %v697
            %v751 = vpop.xlane.xlu0 %750
            %752 = vadd.xlane.f32.xlu0 %v698
            %v753 = vpop.xlane.xlu0 %752
            %754 = vadd.xlane.f32.xlu0 %v699
            %v755 = vpop.xlane.xlu0 %754
            %756 = vadd.xlane.f32.xlu0 %v700
            %v757 = vpop.xlane.xlu0 %756
            %758 = vadd.xlane.f32.xlu0 %v701
            %v759 = vpop.xlane.xlu0 %758
            %760 = vadd.xlane.f32.xlu0 %v702
            %v761 = vpop.xlane.xlu0 %760
            %762 = vadd.xlane.f32.xlu0 %v703
            %v763 = vpop.xlane.xlu0 %762
            %764 = vadd.xlane.f32.xlu0 %v704
            %v765 = vpop.xlane.xlu0 %764
            %766 = vadd.xlane.f32.xlu0 %v705
            %v767 = vpop.xlane.xlu0 %766
            %768 = vadd.xlane.f32.xlu0 %v706
            %v769 = vpop.xlane.xlu0 %768
            %770 = vadd.xlane.f32.xlu0 %v707
            %v771 = vpop.xlane.xlu0 %770
            %v772 = vmul.f32 %v709, 0.0078125
            %v773 = vmul.f32 %v711, 0.0078125
            %v774 = vmul.f32 %v713, 0.0078125
            %v775 = vmul.f32 %v715, 0.0078125
            %v776 = vmul.f32 %v717, 0.0078125
            %v777 = vmul.f32 %v719, 0.0078125
            %v778 = vmul.f32 %v721, 0.0078125
            %v779 = vmul.f32 %v723, 0.0078125
            %v780 = vmul.f32 %v725, 0.0078125
            %v781 = vmul.f32 %v727, 0.0078125
            %v782 = vmul.f32 %v729, 0.0078125
            %v783 = vmul.f32 %v731, 0.0078125
            %v784 = vmul.f32 %v733, 0.0078125
            %v785 = vmul.f32 %v735, 0.0078125
            %v786 = vmul.f32 %v737, 0.0078125
            %v787 = vmul.f32 %v739, 0.0078125
            %v788 = vmul.f32 %v741, 0.0078125
            %v789 = vmul.f32 %v743, 0.0078125
            %v790 = vmul.f32 %v745, 0.0078125
            %v791 = vmul.f32 %v747, 0.0078125
            %v792 = vmul.f32 %v749, 0.0078125
            %v793 = vmul.f32 %v751, 0.0078125
            %v794 = vmul.f32 %v753, 0.0078125
            %v795 = vmul.f32 %v755, 0.0078125
            %v796 = vmul.f32 %v757, 0.0078125
            %v797 = vmul.f32 %v759, 0.0078125
            %v798 = vmul.f32 %v761, 0.0078125
            %v799 = vmul.f32 %v763, 0.0078125
            %v800 = vmul.f32 %v765, 0.0078125
            %v801 = vmul.f32 %v767, 0.0078125
            %v802 = vmul.f32 %v769, 0.0078125
            %v803 = vmul.f32 %v771, 0.0078125
            %v804 = vmul.f32 %v676, %v676
            %v805 = vmul.f32 %v677, %v677
            %v806 = vmul.f32 %v678, %v678
            %v807 = vmul.f32 %v679, %v679
            %v808 = vmul.f32 %v680, %v680
            %v809 = vmul.f32 %v681, %v681
            %v810 = vmul.f32 %v682, %v682
            %v811 = vmul.f32 %v683, %v683
            %v812 = vmul.f32 %v684, %v684
            %v813 = vmul.f32 %v685, %v685
            %v814 = vmul.f32 %v686, %v686
            %v815 = vmul.f32 %v687, %v687
            %v816 = vmul.f32 %v688, %v688
            %v817 = vmul.f32 %v689, %v689
            %v818 = vmul.f32 %v690, %v690
            %v819 = vmul.f32 %v691, %v691
            %v820 = vmul.f32 %v692, %v692
            %v821 = vmul.f32 %v693, %v693
            %v822 = vmul.f32 %v694, %v694
            %v823 = vmul.f32 %v695, %v695
            %v824 = vmul.f32 %v696, %v696
            %v825 = vmul.f32 %v697, %v697
            %v826 = vmul.f32 %v698, %v698
            %v827 = vmul.f32 %v699, %v699
            %v828 = vmul.f32 %v700, %v700
            %v829 = vmul.f32 %v701, %v701
            %v830 = vmul.f32 %v702, %v702
            %v831 = vmul.f32 %v703, %v703
            %v832 = vmul.f32 %v704, %v704
            %v833 = vmul.f32 %v705, %v705
            %v834 = vmul.f32 %v706, %v706
            %v835 = vmul.f32 %v707, %v707
            %836 = vadd.xlane.f32.xlu0 %v804
            %v837 = vpop.xlane.xlu0 %836
            %838 = vadd.xlane.f32.xlu0 %v805
            %v839 = vpop.xlane.xlu0 %838
            %840 = vadd.xlane.f32.xlu0 %v806
            %v841 = vpop.xlane.xlu0 %840
            %842 = vadd.xlane.f32.xlu0 %v807
            %v843 = vpop.xlane.xlu0 %842
            %844 = vadd.xlane.f32.xlu0 %v808
            %v845 = vpop.xlane.xlu0 %844
            %846 = vadd.xlane.f32.xlu0 %v809
            %v847 = vpop.xlane.xlu0 %846
            %848 = vadd.xlane.f32.xlu0 %v810
            %v849 = vpop.xlane.xlu0 %848
            %850 = vadd.xlane.f32.xlu0 %v811
            %v851 = vpop.xlane.xlu0 %850
            %852 = vadd.xlane.f32.xlu0 %v812
            %v853 = vpop.xlane.xlu0 %852
            %854 = vadd.xlane.f32.xlu0 %v813
            %v855 = vpop.xlane.xlu0 %854
            %856 = vadd.xlane.f32.xlu0 %v814
            %v857 = vpop.xlane.xlu0 %856
            %858 = vadd.xlane.f32.xlu0 %v815
            %v859 = vpop.xlane.xlu0 %858
            %860 = vadd.xlane.f32.xlu0 %v816
            %v861 = vpop.xlane.xlu0 %860
            %862 = vadd.xlane.f32.xlu0 %v817
            %v863 = vpop.xlane.xlu0 %862
            %864 = vadd.xlane.f32.xlu0 %v818
            %v865 = vpop.xlane.xlu0 %864
            %866 = vadd.xlane.f32.xlu0 %v819
            %v867 = vpop.xlane.xlu0 %866
            %868 = vadd.xlane.f32.xlu0 %v820
            %v869 = vpop.xlane.xlu0 %868
            %870 = vadd.xlane.f32.xlu0 %v821
            %v871 = vpop.xlane.xlu0 %870
            %872 = vadd.xlane.f32.xlu0 %v822
            %v873 = vpop.xlane.xlu0 %872
            %874 = vadd.xlane.f32.xlu0 %v823
            %v875 = vpop.xlane.xlu0 %874
            %876 = vadd.xlane.f32.xlu0 %v824
            %v877 = vpop.xlane.xlu0 %876
            %878 = vadd.xlane.f32.xlu0 %v825
            %v879 = vpop.xlane.xlu0 %878
            %880 = vadd.xlane.f32.xlu0 %v826
            %v881 = vpop.xlane.xlu0 %880
            %882 = vadd.xlane.f32.xlu0 %v827
            %v883 = vpop.xlane.xlu0 %882
            %884 = vadd.xlane.f32.xlu0 %v828
            %v885 = vpop.xlane.xlu0 %884
            %886 = vadd.xlane.f32.xlu0 %v829
            %v887 = vpop.xlane.xlu0 %886
            %888 = vadd.xlane.f32.xlu0 %v830
            %v889 = vpop.xlane.xlu0 %888
            %890 = vadd.xlane.f32.xlu0 %v831
            %v891 = vpop.xlane.xlu0 %890
            %892 = vadd.xlane.f32.xlu0 %v832
            %v893 = vpop.xlane.xlu0 %892
            %894 = vadd.xlane.f32.xlu0 %v833
            %v895 = vpop.xlane.xlu0 %894
            %896 = vadd.xlane.f32.xlu0 %v834
            %v897 = vpop.xlane.xlu0 %896
            %898 = vadd.xlane.f32.xlu0 %v835
            %v899 = vpop.xlane.xlu0 %898
            %v900 = vmul.f32 %v837, 0.0078125
            %v901 = vmul.f32 %v839, 0.0078125
            %v902 = vmul.f32 %v841, 0.0078125
            %v903 = vmul.f32 %v843, 0.0078125
            %v904 = vmul.f32 %v845, 0.0078125
            %v905 = vmul.f32 %v847, 0.0078125
            %v906 = vmul.f32 %v849, 0.0078125
            %v907 = vmul.f32 %v851, 0.0078125
            %v908 = vmul.f32 %v853, 0.0078125
            %v909 = vmul.f32 %v855, 0.0078125
            %v910 = vmul.f32 %v857, 0.0078125
            %v911 = vmul.f32 %v859, 0.0078125
            %v912 = vmul.f32 %v861, 0.0078125
            %v913 = vmul.f32 %v863, 0.0078125
            %v914 = vmul.f32 %v865, 0.0078125
            %v915 = vmul.f32 %v867, 0.0078125
            %v916 = vmul.f32 %v869, 0.0078125
            %v917 = vmul.f32 %v871, 0.0078125
            %v918 = vmul.f32 %v873, 0.0078125
            %v919 = vmul.f32 %v875, 0.0078125
            %v920 = vmul.f32 %v877, 0.0078125
            %v921 = vmul.f32 %v879, 0.0078125
            %v922 = vmul.f32 %v881, 0.0078125
            %v923 = vmul.f32 %v883, 0.0078125
            %v924 = vmul.f32 %v885, 0.0078125
            %v925 = vmul.f32 %v887, 0.0078125
            %v926 = vmul.f32 %v889, 0.0078125
            %v927 = vmul.f32 %v891, 0.0078125
            %v928 = vmul.f32 %v893, 0.0078125
            %v929 = vmul.f32 %v895, 0.0078125
            %v930 = vmul.f32 %v897, 0.0078125
            %v931 = vmul.f32 %v899, 0.0078125
            %v932 = vmul.f32 %v772, %v772
            %v933 = vmul.f32 %v773, %v773
            %v934 = vmul.f32 %v774, %v774
            %v935 = vmul.f32 %v775, %v775
            %v936 = vmul.f32 %v776, %v776
            %v937 = vmul.f32 %v777, %v777
            %v938 = vmul.f32 %v778, %v778
            %v939 = vmul.f32 %v779, %v779
            %v940 = vmul.f32 %v780, %v780
            %v941 = vmul.f32 %v781, %v781
            %v942 = vmul.f32 %v782, %v782
            %v943 = vmul.f32 %v783, %v783
            %v944 = vmul.f32 %v784, %v784
            %v945 = vmul.f32 %v785, %v785
            %v946 = vmul.f32 %v786, %v786
            %v947 = vmul.f32 %v787, %v787
            %v948 = vmul.f32 %v788, %v788
            %v949 = vmul.f32 %v789, %v789
            %v950 = vmul.f32 %v790, %v790
            %v951 = vmul.f32 %v791, %v791
            %v952 = vmul.f32 %v792, %v792
            %v953 = vmul.f32 %v793, %v793
            %v954 = vmul.f32 %v794, %v794
            %v955 = vmul.f32 %v795, %v795
            %v956 = vmul.f32 %v796, %v796
            %v957 = vmul.f32 %v797, %v797
            %v958 = vmul.f32 %v798, %v798
            %v959 = vmul.f32 %v799, %v799
            %v960 = vmul.f32 %v800, %v800
            %v961 = vmul.f32 %v801, %v801
            %v962 = vmul.f32 %v802, %v802
            %v963 = vmul.f32 %v803, %v803
            %v964 = vsub.f32 %v900, %v932
            %v965 = vsub.f32 %v901, %v933
            %v966 = vsub.f32 %v902, %v934
            %v967 = vsub.f32 %v903, %v935
            %v968 = vsub.f32 %v904, %v936
            %v969 = vsub.f32 %v905, %v937
            %v970 = vsub.f32 %v906, %v938
            %v971 = vsub.f32 %v907, %v939
            %v972 = vsub.f32 %v908, %v940
            %v973 = vsub.f32 %v909, %v941
            %v974 = vsub.f32 %v910, %v942
            %v975 = vsub.f32 %v911, %v943
            %v976 = vsub.f32 %v912, %v944
            %v977 = vsub.f32 %v913, %v945
            %v978 = vsub.f32 %v914, %v946
            %v979 = vsub.f32 %v915, %v947
            %v980 = vsub.f32 %v916, %v948
            %v981 = vsub.f32 %v917, %v949
            %v982 = vsub.f32 %v918, %v950
            %v983 = vsub.f32 %v919, %v951
            %v984 = vsub.f32 %v920, %v952
            %v985 = vsub.f32 %v921, %v953
            %v986 = vsub.f32 %v922, %v954
            %v987 = vsub.f32 %v923, %v955
            %v988 = vsub.f32 %v924, %v956
            %v989 = vsub.f32 %v925, %v957
            %v990 = vsub.f32 %v926, %v958
            %v991 = vsub.f32 %v927, %v959
            %v992 = vsub.f32 %v928, %v960
            %v993 = vsub.f32 %v929, %v961
            %v994 = vsub.f32 %v930, %v962
            %v995 = vsub.f32 %v931, %v963
            %v996 = vadd.f32 %v964, 1e-05
            %v997 = vadd.f32 %v965, 1e-05
            %v998 = vadd.f32 %v966, 1e-05
            %v999 = vadd.f32 %v967, 1e-05
            %v1000 = vadd.f32 %v968, 1e-05
            %v1001 = vadd.f32 %v969, 1e-05
            %v1002 = vadd.f32 %v970, 1e-05
            %v1003 = vadd.f32 %v971, 1e-05
            %v1004 = vadd.f32 %v972, 1e-05
            %v1005 = vadd.f32 %v973, 1e-05
            %v1006 = vadd.f32 %v974, 1e-05
            %v1007 = vadd.f32 %v975, 1e-05
            %v1008 = vadd.f32 %v976, 1e-05
            %v1009 = vadd.f32 %v977, 1e-05
            %v1010 = vadd.f32 %v978, 1e-05
            %v1011 = vadd.f32 %v979, 1e-05
            %v1012 = vadd.f32 %v980, 1e-05
            %v1013 = vadd.f32 %v981, 1e-05
            %v1014 = vadd.f32 %v982, 1e-05
            %v1015 = vadd.f32 %v983, 1e-05
            %v1016 = vadd.f32 %v984, 1e-05
            %v1017 = vadd.f32 %v985, 1e-05
            %v1018 = vadd.f32 %v986, 1e-05
            %v1019 = vadd.f32 %v987, 1e-05
            %v1020 = vadd.f32 %v988, 1e-05
            %v1021 = vadd.f32 %v989, 1e-05
            %v1022 = vadd.f32 %v990, 1e-05
            %v1023 = vadd.f32 %v991, 1e-05
            %v1024 = vadd.f32 %v992, 1e-05
            %v1025 = vadd.f32 %v993, 1e-05
            %v1026 = vadd.f32 %v994, 1e-05
            %v1027 = vadd.f32 %v995, 1e-05
            %v1028 = vrsqrt.pop %v996
            %v1029 = vrsqrt.pop %v997
            %v1030 = vrsqrt.pop %v998
            %v1031 = vrsqrt.pop %v999
            %v1032 = vrsqrt.pop %v1000
            %v1033 = vrsqrt.pop %v1001
            %v1034 = vrsqrt.pop %v1002
            %v1035 = vrsqrt.pop %v1003
            %v1036 = vrsqrt.pop %v1004
            %v1037 = vrsqrt.pop %v1005
            %v1038 = vrsqrt.pop %v1006
            %v1039 = vrsqrt.pop %v1007
            %v1040 = vrsqrt.pop %v1008
            %v1041 = vrsqrt.pop %v1009
            %v1042 = vrsqrt.pop %v1010
            %v1043 = vrsqrt.pop %v1011
            %v1044 = vrsqrt.pop %v1012
            %v1045 = vrsqrt.pop %v1013
            %v1046 = vrsqrt.pop %v1014
            %v1047 = vrsqrt.pop %v1015
            %v1048 = vrsqrt.pop %v1016
            %v1049 = vrsqrt.pop %v1017
            %v1050 = vrsqrt.pop %v1018
            %v1051 = vrsqrt.pop %v1019
            %v1052 = vrsqrt.pop %v1020
            %v1053 = vrsqrt.pop %v1021
            %v1054 = vrsqrt.pop %v1022
            %v1055 = vrsqrt.pop %v1023
            %v1056 = vrsqrt.pop %v1024
            %v1057 = vrsqrt.pop %v1025
            %v1058 = vrsqrt.pop %v1026
            %v1059 = vrsqrt.pop %v1027
            %v1060 = vsub.f32 %v676, %v772
            %v1061 = vsub.f32 %v677, %v773
            %v1062 = vsub.f32 %v678, %v774
            %v1063 = vsub.f32 %v679, %v775
            %v1064 = vsub.f32 %v680, %v776
            %v1065 = vsub.f32 %v681, %v777
            %v1066 = vsub.f32 %v682, %v778
            %v1067 = vsub.f32 %v683, %v779
            %v1068 = vsub.f32 %v684, %v780
            %v1069 = vsub.f32 %v685, %v781
            %v1070 = vsub.f32 %v686, %v782
            %v1071 = vsub.f32 %v687, %v783
            %v1072 = vsub.f32 %v688, %v784
            %v1073 = vsub.f32 %v689, %v785
            %v1074 = vsub.f32 %v690, %v786
            %v1075 = vsub.f32 %v691, %v787
            %v1076 = vsub.f32 %v692, %v788
            %v1077 = vsub.f32 %v693, %v789
            %v1078 = vsub.f32 %v694, %v790
            %v1079 = vsub.f32 %v695, %v791
            %v1080 = vsub.f32 %v696, %v792
            %v1081 = vsub.f32 %v697, %v793
            %v1082 = vsub.f32 %v698, %v794
            %v1083 = vsub.f32 %v699, %v795
            %v1084 = vsub.f32 %v700, %v796
            %v1085 = vsub.f32 %v701, %v797
            %v1086 = vsub.f32 %v702, %v798
            %v1087 = vsub.f32 %v703, %v799
            %v1088 = vsub.f32 %v704, %v800
            %v1089 = vsub.f32 %v705, %v801
            %v1090 = vsub.f32 %v706, %v802
            %v1091 = vsub.f32 %v707, %v803
            %v1092 = vmul.f32 %v1060, %v1028
            %v1093 = vmul.f32 %v1061, %v1029
            %v1094 = vmul.f32 %v1062, %v1030
            %v1095 = vmul.f32 %v1063, %v1031
            %v1096 = vmul.f32 %v1064, %v1032
            %v1097 = vmul.f32 %v1065, %v1033
            %v1098 = vmul.f32 %v1066, %v1034
            %v1099 = vmul.f32 %v1067, %v1035
            %v1100 = vmul.f32 %v1068, %v1036
            %v1101 = vmul.f32 %v1069, %v1037
            %v1102 = vmul.f32 %v1070, %v1038
            %v1103 = vmul.f32 %v1071, %v1039
            %v1104 = vmul.f32 %v1072, %v1040
            %v1105 = vmul.f32 %v1073, %v1041
            %v1106 = vmul.f32 %v1074, %v1042
            %v1107 = vmul.f32 %v1075, %v1043
            %v1108 = vmul.f32 %v1076, %v1044
            %v1109 = vmul.f32 %v1077, %v1045
            %v1110 = vmul.f32 %v1078, %v1046
            %v1111 = vmul.f32 %v1079, %v1047
            %v1112 = vmul.f32 %v1080, %v1048
            %v1113 = vmul.f32 %v1081, %v1049
            %v1114 = vmul.f32 %v1082, %v1050
            %v1115 = vmul.f32 %v1083, %v1051
            %v1116 = vmul.f32 %v1084, %v1052
            %v1117 = vmul.f32 %v1085, %v1053
            %v1118 = vmul.f32 %v1086, %v1054
            %v1119 = vmul.f32 %v1087, %v1055
            %v1120 = vmul.f32 %v1088, %v1056
            %v1121 = vmul.f32 %v1089, %v1057
            %v1122 = vmul.f32 %v1090, %v1058
            %v1123 = vmul.f32 %v1091, %v1059
            %v1124 = vpack.c.bf16 %v1093, %v1092
            %v1125 = vpack.c.bf16 %v1095, %v1094
            %v1126 = vpack.c.bf16 %v1097, %v1096
            %v1127 = vpack.c.bf16 %v1099, %v1098
            %v1128 = vpack.c.bf16 %v1101, %v1100
            %v1129 = vpack.c.bf16 %v1103, %v1102
            %v1130 = vpack.c.bf16 %v1105, %v1104
            %v1131 = vpack.c.bf16 %v1107, %v1106
            %v1132 = vpack.c.bf16 %v1109, %v1108
            %v1133 = vpack.c.bf16 %v1111, %v1110
            %v1134 = vpack.c.bf16 %v1113, %v1112
            %v1135 = vpack.c.bf16 %v1115, %v1114
            %v1136 = vpack.c.bf16 %v1117, %v1116
            %v1137 = vpack.c.bf16 %v1119, %v1118
            %v1138 = vpack.c.bf16 %v1121, %v1120
            %v1139 = vpack.c.bf16 %v1123, %v1122
            %v1140 = vlaneseq
            %v1141 = vshrl.u32 %v1140, 7
            %v1142 = vsub.s32 0, %v1141
            %v1143 = vrot.slane %v432, %v1142
            %v1160 = vunpack.c.l.b16 %v439
            %v1161 = vunpack.c.l.b16 %v440
            %v1162 = vunpack.c.l.b16 %v441
            %v1163 = vunpack.c.l.b16 %v442
            %v1164 = vunpack.c.l.b16 %v443
            %v1165 = vunpack.c.l.b16 %v444
            %v1166 = vunpack.c.l.b16 %v445
            %v1167 = vunpack.c.l.b16 %v446
            %v1168 = vunpack.c.l.b16 %v447
            %v1169 = vunpack.c.l.b16 %v448
            %v1170 = vunpack.c.l.b16 %v449
            %v1171 = vunpack.c.l.b16 %v450
            %v1172 = vunpack.c.l.b16 %v451
            %v1173 = vunpack.c.l.b16 %v452
            %v1174 = vunpack.c.l.b16 %v453
            %v1175 = vunpack.c.l.b16 %v454
            %v1176 = vpack.c.b16 %v1161, %v1160
            %v1177 = vpack.c.b16 %v1163, %v1162
            %v1178 = vpack.c.b16 %v1165, %v1164
            %v1179 = vpack.c.b16 %v1167, %v1166
            %v1180 = vpack.c.b16 %v1169, %v1168
            %v1181 = vpack.c.b16 %v1171, %v1170
            %v1182 = vpack.c.b16 %v1173, %v1172
            %v1183 = vpack.c.b16 %v1175, %v1174
            %1192 = vmatprep.subr.bf16.mxu0 0
            %1193 = vmatpush1.bf16.msra.mxu0 %v1183
            %1194 = vmatprep.subr.bf16.mxu0 0
            %1195 = vmatpush1.bf16.msra.mxu0 %v1182
            %1196 = vmatprep.subr.bf16.mxu0 0
            %1197 = vmatpush1.bf16.msra.mxu0 %v1181
            %1198 = vmatprep.subr.bf16.mxu0 0
            %1199 = vmatpush1.bf16.msra.mxu0 %v1180
            %1200 = vmatprep.subr.bf16.mxu0 0
            %1201 = vmatpush1.bf16.msra.mxu0 %v1179
            %1202 = vmatprep.subr.bf16.mxu0 0
            %1203 = vmatpush1.bf16.msra.mxu0 %v1178
            %1204 = vmatprep.subr.bf16.mxu0 0
            %1205 = vmatpush1.bf16.msra.mxu0 %v1177
            %1206 = vmatprep.subr.bf16.mxu0 0
            %1207 = vmatpush1.bf16.msra.mxu0 %v1176
            %1208 = vmatprep.subr.bf16.mxu0 0
            %1209 = vmatpush2.bf16.msra.mxu0 0
            %1210 = vmatprep.subr.bf16.mxu0 0
            %1211 = vmatpush2.bf16.msra.mxu0 0
            %1212 = vmatprep.subr.bf16.mxu0 0
            %1213 = vmatpush2.bf16.msra.mxu0 0
            %1214 = vmatprep.subr.bf16.mxu0 0
            %1215 = vmatpush2.bf16.msra.mxu0 0
            %1216 = vmatprep.subr.bf16.mxu0 0
            %1217 = vmatpush2.bf16.msra.mxu0 0
            %1218 = vmatprep.subr.bf16.mxu0 0
            %1219 = vmatpush2.bf16.msra.mxu0 0
            %1220 = vmatprep.subr.bf16.mxu0 0
            %1221 = vmatpush2.bf16.msra.mxu0 0
            %1222 = vmatprep.subr.bf16.mxu0 0
            %1223 = vmatpush2.bf16.msra.mxu0 0
            %1224 = vmatprep.mubr.bf16.mxu0 0
            %1225 = vmatmul.mubr.bf16.gmra.mxu0 %v1124
            %v1226 = vpop.f32.mrf.mxu0
            %v1227 = vadd.f32 %v1143, %v1226
            %v1228 = vpop.f32.mrf.mxu0
            %v1229 = vpop.f32.mrf.mxu0
            %v1230 = vadd.f32 %v1143, %v1229
            %v1231 = vpop.f32.mrf.mxu0
            %1232 = vmatprep.mubr.bf16.mxu0 0
            %1233 = vmatmul.mubr.bf16.gmra.mxu0 %v1125
            %v1234 = vpop.f32.mrf.mxu0
            %v1235 = vadd.f32 %v1143, %v1234
            %v1236 = vpop.f32.mrf.mxu0
            %v1237 = vpop.f32.mrf.mxu0
            %v1238 = vadd.f32 %v1143, %v1237
            %v1239 = vpop.f32.mrf.mxu0
            %1240 = vmatprep.mubr.bf16.mxu0 0
            %1241 = vmatmul.mubr.bf16.gmra.mxu0 %v1126
            %v1242 = vpop.f32.mrf.mxu0
            %v1243 = vadd.f32 %v1143, %v1242
            %v1244 = vpop.f32.mrf.mxu0
            %v1245 = vpop.f32.mrf.mxu0
            %v1246 = vadd.f32 %v1143, %v1245
            %v1247 = vpop.f32.mrf.mxu0
            %1248 = vmatprep.mubr.bf16.mxu0 0
            %1249 = vmatmul.mubr.bf16.gmra.mxu0 %v1127
            %v1250 = vpop.f32.mrf.mxu0
            %v1251 = vadd.f32 %v1143, %v1250
            %v1252 = vpop.f32.mrf.mxu0
            %v1253 = vpop.f32.mrf.mxu0
            %v1254 = vadd.f32 %v1143, %v1253
            %v1255 = vpop.f32.mrf.mxu0
            %1256 = vmatprep.mubr.bf16.mxu0 0
            %1257 = vmatmul.mubr.bf16.gmra.mxu0 %v1128
            %v1258 = vpop.f32.mrf.mxu0
            %v1259 = vadd.f32 %v1143, %v1258
            %v1260 = vpop.f32.mrf.mxu0
            %v1261 = vpop.f32.mrf.mxu0
            %v1262 = vadd.f32 %v1143, %v1261
            %v1263 = vpop.f32.mrf.mxu0
            %1264 = vmatprep.mubr.bf16.mxu0 0
            %1265 = vmatmul.mubr.bf16.gmra.mxu0 %v1129
            %v1266 = vpop.f32.mrf.mxu0
            %v1267 = vadd.f32 %v1143, %v1266
            %v1268 = vpop.f32.mrf.mxu0
            %v1269 = vpop.f32.mrf.mxu0
            %v1270 = vadd.f32 %v1143, %v1269
            %v1271 = vpop.f32.mrf.mxu0
            %1272 = vmatprep.mubr.bf16.mxu0 0
            %1273 = vmatmul.mubr.bf16.gmra.mxu0 %v1130
            %v1274 = vpop.f32.mrf.mxu0
            %v1275 = vadd.f32 %v1143, %v1274
            %v1276 = vpop.f32.mrf.mxu0
            %v1277 = vpop.f32.mrf.mxu0
            %v1278 = vadd.f32 %v1143, %v1277
            %v1279 = vpop.f32.mrf.mxu0
            %1280 = vmatprep.mubr.bf16.mxu0 0
            %1281 = vmatmul.mubr.bf16.gmra.mxu0 %v1131
            %v1282 = vpop.f32.mrf.mxu0
            %v1283 = vadd.f32 %v1143, %v1282
            %v1284 = vpop.f32.mrf.mxu0
            %v1285 = vpop.f32.mrf.mxu0
            %v1286 = vadd.f32 %v1143, %v1285
            %v1287 = vpop.f32.mrf.mxu0
            %1288 = vmatprep.mubr.bf16.mxu0 0
            %1289 = vmatmul.mubr.bf16.gmra.mxu0 %v1132
            %v1290 = vpop.f32.mrf.mxu0
            %v1291 = vadd.f32 %v1143, %v1290
            %v1292 = vpop.f32.mrf.mxu0
            %v1293 = vpop.f32.mrf.mxu0
            %v1294 = vadd.f32 %v1143, %v1293
            %v1295 = vpop.f32.mrf.mxu0
            %1296 = vmatprep.mubr.bf16.mxu0 0
            %1297 = vmatmul.mubr.bf16.gmra.mxu0 %v1133
            %v1298 = vpop.f32.mrf.mxu0
            %v1299 = vadd.f32 %v1143, %v1298
            %v1300 = vpop.f32.mrf.mxu0
            %v1301 = vpop.f32.mrf.mxu0
            %v1302 = vadd.f32 %v1143, %v1301
            %v1303 = vpop.f32.mrf.mxu0
            %1304 = vmatprep.mubr.bf16.mxu0 0
            %1305 = vmatmul.mubr.bf16.gmra.mxu0 %v1134
            %v1306 = vpop.f32.mrf.mxu0
            %v1307 = vadd.f32 %v1143, %v1306
            %v1308 = vpop.f32.mrf.mxu0
            %v1309 = vpop.f32.mrf.mxu0
            %v1310 = vadd.f32 %v1143, %v1309
            %v1311 = vpop.f32.mrf.mxu0
            %1312 = vmatprep.mubr.bf16.mxu0 0
            %1313 = vmatmul.mubr.bf16.gmra.mxu0 %v1135
            %v1314 = vpop.f32.mrf.mxu0
            %v1315 = vadd.f32 %v1143, %v1314
            %v1316 = vpop.f32.mrf.mxu0
            %v1317 = vpop.f32.mrf.mxu0
            %v1318 = vadd.f32 %v1143, %v1317
            %v1319 = vpop.f32.mrf.mxu0
            %1320 = vmatprep.mubr.bf16.mxu0 0
            %1321 = vmatmul.mubr.bf16.gmra.mxu0 %v1136
            %v1322 = vpop.f32.mrf.mxu0
            %v1323 = vadd.f32 %v1143, %v1322
            %v1324 = vpop.f32.mrf.mxu0
            %v1325 = vpop.f32.mrf.mxu0
            %v1326 = vadd.f32 %v1143, %v1325
            %v1327 = vpop.f32.mrf.mxu0
            %1328 = vmatprep.mubr.bf16.mxu0 0
            %1329 = vmatmul.mubr.bf16.gmra.mxu0 %v1137
            %v1330 = vpop.f32.mrf.mxu0
            %v1331 = vadd.f32 %v1143, %v1330
            %v1332 = vpop.f32.mrf.mxu0
            %v1333 = vpop.f32.mrf.mxu0
            %v1334 = vadd.f32 %v1143, %v1333
            %v1335 = vpop.f32.mrf.mxu0
            %1336 = vmatprep.mubr.bf16.mxu0 0
            %1337 = vmatmul.mubr.bf16.gmra.mxu0 %v1138
            %v1338 = vpop.f32.mrf.mxu0
            %v1339 = vadd.f32 %v1143, %v1338
            %v1340 = vpop.f32.mrf.mxu0
            %v1341 = vpop.f32.mrf.mxu0
            %v1342 = vadd.f32 %v1143, %v1341
            %v1343 = vpop.f32.mrf.mxu0
            %1344 = vmatprep.mubr.bf16.mxu0 0
            %1345 = vmatmul.mubr.bf16.gmra.mxu0 %v1139
            %v1346 = vpop.f32.mrf.mxu0
            %v1347 = vadd.f32 %v1143, %v1346
            %v1348 = vpop.f32.mrf.mxu0
            %v1349 = vpop.f32.mrf.mxu0
            %v1350 = vadd.f32 %v1143, %v1349
            %v1351 = vpop.f32.mrf.mxu0
            %1352 = vdwg.mxu0
            %v1353 = vmax.f32 %v1227, 0.0
            %v1354 = vmax.f32 %v1230, 0.0
            %v1355 = vmax.f32 %v1235, 0.0
            %v1356 = vmax.f32 %v1238, 0.0
            %v1357 = vmax.f32 %v1243, 0.0
            %v1358 = vmax.f32 %v1246, 0.0
            %v1359 = vmax.f32 %v1251, 0.0
            %v1360 = vmax.f32 %v1254, 0.0
            %v1361 = vmax.f32 %v1259, 0.0
            %v1362 = vmax.f32 %v1262, 0.0
            %v1363 = vmax.f32 %v1267, 0.0
            %v1364 = vmax.f32 %v1270, 0.0
            %v1365 = vmax.f32 %v1275, 0.0
            %v1366 = vmax.f32 %v1278, 0.0
            %v1367 = vmax.f32 %v1283, 0.0
            %v1368 = vmax.f32 %v1286, 0.0
            %v1369 = vmax.f32 %v1291, 0.0
            %v1370 = vmax.f32 %v1294, 0.0
            %v1371 = vmax.f32 %v1299, 0.0
            %v1372 = vmax.f32 %v1302, 0.0
            %v1373 = vmax.f32 %v1307, 0.0
            %v1374 = vmax.f32 %v1310, 0.0
            %v1375 = vmax.f32 %v1315, 0.0
            %v1376 = vmax.f32 %v1318, 0.0
            %v1377 = vmax.f32 %v1323, 0.0
            %v1378 = vmax.f32 %v1326, 0.0
            %v1379 = vmax.f32 %v1331, 0.0
            %v1380 = vmax.f32 %v1334, 0.0
            %v1381 = vmax.f32 %v1339, 0.0
            %v1382 = vmax.f32 %v1342, 0.0
            %v1383 = vmax.f32 %v1347, 0.0
            %v1384 = vmax.f32 %v1350, 0.0
            %1385 = vadd.xlane.f32.xlu0 %v1353
            %v1386 = vpop.xlane.xlu0 %1385
            %1387 = vadd.xlane.f32.xlu0 %v1354
            %v1388 = vpop.xlane.xlu0 %1387
            %1389 = vadd.xlane.f32.xlu0 %v1355
            %v1390 = vpop.xlane.xlu0 %1389
            %1391 = vadd.xlane.f32.xlu0 %v1356
            %v1392 = vpop.xlane.xlu0 %1391
            %1393 = vadd.xlane.f32.xlu0 %v1357
            %v1394 = vpop.xlane.xlu0 %1393
            %1395 = vadd.xlane.f32.xlu0 %v1358
            %v1396 = vpop.xlane.xlu0 %1395
            %1397 = vadd.xlane.f32.xlu0 %v1359
            %v1398 = vpop.xlane.xlu0 %1397
            %1399 = vadd.xlane.f32.xlu0 %v1360
            %v1400 = vpop.xlane.xlu0 %1399
            %1401 = vadd.xlane.f32.xlu0 %v1361
            %v1402 = vpop.xlane.xlu0 %1401
            %1403 = vadd.xlane.f32.xlu0 %v1362
            %v1404 = vpop.xlane.xlu0 %1403
            %1405 = vadd.xlane.f32.xlu0 %v1363
            %v1406 = vpop.xlane.xlu0 %1405
            %1407 = vadd.xlane.f32.xlu0 %v1364
            %v1408 = vpop.xlane.xlu0 %1407
            %1409 = vadd.xlane.f32.xlu0 %v1365
            %v1410 = vpop.xlane.xlu0 %1409
            %1411 = vadd.xlane.f32.xlu0 %v1366
            %v1412 = vpop.xlane.xlu0 %1411
            %1413 = vadd.xlane.f32.xlu0 %v1367
            %v1414 = vpop.xlane.xlu0 %1413
            %1415 = vadd.xlane.f32.xlu0 %v1368
            %v1416 = vpop.xlane.xlu0 %1415
            %1417 = vadd.xlane.f32.xlu0 %v1369
            %v1418 = vpop.xlane.xlu0 %1417
            %1419 = vadd.xlane.f32.xlu0 %v1370
            %v1420 = vpop.xlane.xlu0 %1419
            %1421 = vadd.xlane.f32.xlu0 %v1371
            %v1422 = vpop.xlane.xlu0 %1421
            %1423 = vadd.xlane.f32.xlu0 %v1372
            %v1424 = vpop.xlane.xlu0 %1423
            %1425 = vadd.xlane.f32.xlu0 %v1373
            %v1426 = vpop.xlane.xlu0 %1425
            %1427 = vadd.xlane.f32.xlu0 %v1374
            %v1428 = vpop.xlane.xlu0 %1427
            %1429 = vadd.xlane.f32.xlu0 %v1375
            %v1430 = vpop.xlane.xlu0 %1429
            %1431 = vadd.xlane.f32.xlu0 %v1376
            %v1432 = vpop.xlane.xlu0 %1431
            %1433 = vadd.xlane.f32.xlu0 %v1377
            %v1434 = vpop.xlane.xlu0 %1433
            %1435 = vadd.xlane.f32.xlu0 %v1378
            %v1436 = vpop.xlane.xlu0 %1435
            %1437 = vadd.xlane.f32.xlu0 %v1379
            %v1438 = vpop.xlane.xlu0 %1437
            %1439 = vadd.xlane.f32.xlu0 %v1380
            %v1440 = vpop.xlane.xlu0 %1439
            %1441 = vadd.xlane.f32.xlu0 %v1381
            %v1442 = vpop.xlane.xlu0 %1441
            %1443 = vadd.xlane.f32.xlu0 %v1382
            %v1444 = vpop.xlane.xlu0 %1443
            %1445 = vadd.xlane.f32.xlu0 %v1383
            %v1446 = vpop.xlane.xlu0 %1445
            %1447 = vadd.xlane.f32.xlu0 %v1384
            %v1448 = vpop.xlane.xlu0 %1447
            %v1449 = vmul.f32 %v1386, 0.0078125
            %v1450 = vmul.f32 %v1388, 0.0078125
            %v1451 = vmul.f32 %v1390, 0.0078125
            %v1452 = vmul.f32 %v1392, 0.0078125
            %v1453 = vmul.f32 %v1394, 0.0078125
            %v1454 = vmul.f32 %v1396, 0.0078125
            %v1455 = vmul.f32 %v1398, 0.0078125
            %v1456 = vmul.f32 %v1400, 0.0078125
            %v1457 = vmul.f32 %v1402, 0.0078125
            %v1458 = vmul.f32 %v1404, 0.0078125
            %v1459 = vmul.f32 %v1406, 0.0078125
            %v1460 = vmul.f32 %v1408, 0.0078125
            %v1461 = vmul.f32 %v1410, 0.0078125
            %v1462 = vmul.f32 %v1412, 0.0078125
            %v1463 = vmul.f32 %v1414, 0.0078125
            %v1464 = vmul.f32 %v1416, 0.0078125
            %v1465 = vmul.f32 %v1418, 0.0078125
            %v1466 = vmul.f32 %v1420, 0.0078125
            %v1467 = vmul.f32 %v1422, 0.0078125
            %v1468 = vmul.f32 %v1424, 0.0078125
            %v1469 = vmul.f32 %v1426, 0.0078125
            %v1470 = vmul.f32 %v1428, 0.0078125
            %v1471 = vmul.f32 %v1430, 0.0078125
            %v1472 = vmul.f32 %v1432, 0.0078125
            %v1473 = vmul.f32 %v1434, 0.0078125
            %v1474 = vmul.f32 %v1436, 0.0078125
            %v1475 = vmul.f32 %v1438, 0.0078125
            %v1476 = vmul.f32 %v1440, 0.0078125
            %v1477 = vmul.f32 %v1442, 0.0078125
            %v1478 = vmul.f32 %v1444, 0.0078125
            %v1479 = vmul.f32 %v1446, 0.0078125
            %v1480 = vmul.f32 %v1448, 0.0078125
            %v1481 = vmul.f32 %v1353, %v1353
            %v1482 = vmul.f32 %v1354, %v1354
            %v1483 = vmul.f32 %v1355, %v1355
            %v1484 = vmul.f32 %v1356, %v1356
            %v1485 = vmul.f32 %v1357, %v1357
            %v1486 = vmul.f32 %v1358, %v1358
            %v1487 = vmul.f32 %v1359, %v1359
            %v1488 = vmul.f32 %v1360, %v1360
            %v1489 = vmul.f32 %v1361, %v1361
            %v1490 = vmul.f32 %v1362, %v1362
            %v1491 = vmul.f32 %v1363, %v1363
            %v1492 = vmul.f32 %v1364, %v1364
            %v1493 = vmul.f32 %v1365, %v1365
            %v1494 = vmul.f32 %v1366, %v1366
            %v1495 = vmul.f32 %v1367, %v1367
            %v1496 = vmul.f32 %v1368, %v1368
            %v1497 = vmul.f32 %v1369, %v1369
            %v1498 = vmul.f32 %v1370, %v1370
            %v1499 = vmul.f32 %v1371, %v1371
            %v1500 = vmul.f32 %v1372, %v1372
            %v1501 = vmul.f32 %v1373, %v1373
            %v1502 = vmul.f32 %v1374, %v1374
            %v1503 = vmul.f32 %v1375, %v1375
            %v1504 = vmul.f32 %v1376, %v1376
            %v1505 = vmul.f32 %v1377, %v1377
            %v1506 = vmul.f32 %v1378, %v1378
            %v1507 = vmul.f32 %v1379, %v1379
            %v1508 = vmul.f32 %v1380, %v1380
            %v1509 = vmul.f32 %v1381, %v1381
            %v1510 = vmul.f32 %v1382, %v1382
            %v1511 = vmul.f32 %v1383, %v1383
            %v1512 = vmul.f32 %v1384, %v1384
            %1513 = vadd.xlane.f32.xlu0 %v1481
            %v1514 = vpop.xlane.xlu0 %1513
            %1515 = vadd.xlane.f32.xlu0 %v1482
            %v1516 = vpop.xlane.xlu0 %1515
            %1517 = vadd.xlane.f32.xlu0 %v1483
            %v1518 = vpop.xlane.xlu0 %1517
            %1519 = vadd.xlane.f32.xlu0 %v1484
            %v1520 = vpop.xlane.xlu0 %1519
            %1521 = vadd.xlane.f32.xlu0 %v1485
            %v1522 = vpop.xlane.xlu0 %1521
            %1523 = vadd.xlane.f32.xlu0 %v1486
            %v1524 = vpop.xlane.xlu0 %1523
            %1525 = vadd.xlane.f32.xlu0 %v1487
            %v1526 = vpop.xlane.xlu0 %1525
            %1527 = vadd.xlane.f32.xlu0 %v1488
            %v1528 = vpop.xlane.xlu0 %1527
            %1529 = vadd.xlane.f32.xlu0 %v1489
            %v1530 = vpop.xlane.xlu0 %1529
            %1531 = vadd.xlane.f32.xlu0 %v1490
            %v1532 = vpop.xlane.xlu0 %1531
            %1533 = vadd.xlane.f32.xlu0 %v1491
            %v1534 = vpop.xlane.xlu0 %1533
            %1535 = vadd.xlane.f32.xlu0 %v1492
            %v1536 = vpop.xlane.xlu0 %1535
            %1537 = vadd.xlane.f32.xlu0 %v1493
            %v1538 = vpop.xlane.xlu0 %1537
            %1539 = vadd.xlane.f32.xlu0 %v1494
            %v1540 = vpop.xlane.xlu0 %1539
            %1541 = vadd.xlane.f32.xlu0 %v1495
            %v1542 = vpop.xlane.xlu0 %1541
            %1543 = vadd.xlane.f32.xlu0 %v1496
            %v1544 = vpop.xlane.xlu0 %1543
            %1545 = vadd.xlane.f32.xlu0 %v1497
            %v1546 = vpop.xlane.xlu0 %1545
            %1547 = vadd.xlane.f32.xlu0 %v1498
            %v1548 = vpop.xlane.xlu0 %1547
            %1549 = vadd.xlane.f32.xlu0 %v1499
            %v1550 = vpop.xlane.xlu0 %1549
            %1551 = vadd.xlane.f32.xlu0 %v1500
            %v1552 = vpop.xlane.xlu0 %1551
            %1553 = vadd.xlane.f32.xlu0 %v1501
            %v1554 = vpop.xlane.xlu0 %1553
            %1555 = vadd.xlane.f32.xlu0 %v1502
            %v1556 = vpop.xlane.xlu0 %1555
            %1557 = vadd.xlane.f32.xlu0 %v1503
            %v1558 = vpop.xlane.xlu0 %1557
            %1559 = vadd.xlane.f32.xlu0 %v1504
            %v1560 = vpop.xlane.xlu0 %1559
            %1561 = vadd.xlane.f32.xlu0 %v1505
            %v1562 = vpop.xlane.xlu0 %1561
            %1563 = vadd.xlane.f32.xlu0 %v1506
            %v1564 = vpop.xlane.xlu0 %1563
            %1565 = vadd.xlane.f32.xlu0 %v1507
            %v1566 = vpop.xlane.xlu0 %1565
            %1567 = vadd.xlane.f32.xlu0 %v1508
            %v1568 = vpop.xlane.xlu0 %1567
            %1569 = vadd.xlane.f32.xlu0 %v1509
            %v1570 = vpop.xlane.xlu0 %1569
            %1571 = vadd.xlane.f32.xlu0 %v1510
            %v1572 = vpop.xlane.xlu0 %1571
            %1573 = vadd.xlane.f32.xlu0 %v1511
            %v1574 = vpop.xlane.xlu0 %1573
            %1575 = vadd.xlane.f32.xlu0 %v1512
            %v1576 = vpop.xlane.xlu0 %1575
            %v1577 = vmul.f32 %v1514, 0.0078125
            %v1578 = vmul.f32 %v1516, 0.0078125
            %v1579 = vmul.f32 %v1518, 0.0078125
            %v1580 = vmul.f32 %v1520, 0.0078125
            %v1581 = vmul.f32 %v1522, 0.0078125
            %v1582 = vmul.f32 %v1524, 0.0078125
            %v1583 = vmul.f32 %v1526, 0.0078125
            %v1584 = vmul.f32 %v1528, 0.0078125
            %v1585 = vmul.f32 %v1530, 0.0078125
            %v1586 = vmul.f32 %v1532, 0.0078125
            %v1587 = vmul.f32 %v1534, 0.0078125
            %v1588 = vmul.f32 %v1536, 0.0078125
            %v1589 = vmul.f32 %v1538, 0.0078125
            %v1590 = vmul.f32 %v1540, 0.0078125
            %v1591 = vmul.f32 %v1542, 0.0078125
            %v1592 = vmul.f32 %v1544, 0.0078125
            %v1593 = vmul.f32 %v1546, 0.0078125
            %v1594 = vmul.f32 %v1548, 0.0078125
            %v1595 = vmul.f32 %v1550, 0.0078125
            %v1596 = vmul.f32 %v1552, 0.0078125
            %v1597 = vmul.f32 %v1554, 0.0078125
            %v1598 = vmul.f32 %v1556, 0.0078125
            %v1599 = vmul.f32 %v1558, 0.0078125
            %v1600 = vmul.f32 %v1560, 0.0078125
            %v1601 = vmul.f32 %v1562, 0.0078125
            %v1602 = vmul.f32 %v1564, 0.0078125
            %v1603 = vmul.f32 %v1566, 0.0078125
            %v1604 = vmul.f32 %v1568, 0.0078125
            %v1605 = vmul.f32 %v1570, 0.0078125
            %v1606 = vmul.f32 %v1572, 0.0078125
            %v1607 = vmul.f32 %v1574, 0.0078125
            %v1608 = vmul.f32 %v1576, 0.0078125
            %v1609 = vlaneseq
            %v1610 = vshrl.u32 %v1609, 7
            %v1611 = vsub.s32 1, %v1610
            %v1612 = vrot.slane %v432, %v1611
            %v1613 = vmul.f32 %v1353, %v1612
            %v1614 = vmul.f32 %v1354, %v1612
            %v1615 = vmul.f32 %v1355, %v1612
            %v1616 = vmul.f32 %v1356, %v1612
            %v1617 = vmul.f32 %v1357, %v1612
            %v1618 = vmul.f32 %v1358, %v1612
            %v1619 = vmul.f32 %v1359, %v1612
            %v1620 = vmul.f32 %v1360, %v1612
            %v1621 = vmul.f32 %v1361, %v1612
            %v1622 = vmul.f32 %v1362, %v1612
            %v1623 = vmul.f32 %v1363, %v1612
            %v1624 = vmul.f32 %v1364, %v1612
            %v1625 = vmul.f32 %v1365, %v1612
            %v1626 = vmul.f32 %v1366, %v1612
            %v1627 = vmul.f32 %v1367, %v1612
            %v1628 = vmul.f32 %v1368, %v1612
            %v1629 = vmul.f32 %v1369, %v1612
            %v1630 = vmul.f32 %v1370, %v1612
            %v1631 = vmul.f32 %v1371, %v1612
            %v1632 = vmul.f32 %v1372, %v1612
            %v1633 = vmul.f32 %v1373, %v1612
            %v1634 = vmul.f32 %v1374, %v1612
            %v1635 = vmul.f32 %v1375, %v1612
            %v1636 = vmul.f32 %v1376, %v1612
            %v1637 = vmul.f32 %v1377, %v1612
            %v1638 = vmul.f32 %v1378, %v1612
            %v1639 = vmul.f32 %v1379, %v1612
            %v1640 = vmul.f32 %v1380, %v1612
            %v1641 = vmul.f32 %v1381, %v1612
            %v1642 = vmul.f32 %v1382, %v1612
            %v1643 = vmul.f32 %v1383, %v1612
            %v1644 = vmul.f32 %v1384, %v1612
            %1645 = vadd.xlane.f32.xlu0 %v1613
            %v1646 = vpop.xlane.xlu0 %1645
            %1647 = vadd.xlane.f32.xlu0 %v1614
            %v1648 = vpop.xlane.xlu0 %1647
            %1649 = vadd.xlane.f32.xlu0 %v1615
            %v1650 = vpop.xlane.xlu0 %1649
            %1651 = vadd.xlane.f32.xlu0 %v1616
            %v1652 = vpop.xlane.xlu0 %1651
            %1653 = vadd.xlane.f32.xlu0 %v1617
            %v1654 = vpop.xlane.xlu0 %1653
            %1655 = vadd.xlane.f32.xlu0 %v1618
            %v1656 = vpop.xlane.xlu0 %1655
            %1657 = vadd.xlane.f32.xlu0 %v1619
            %v1658 = vpop.xlane.xlu0 %1657
            %1659 = vadd.xlane.f32.xlu0 %v1620
            %v1660 = vpop.xlane.xlu0 %1659
            %1661 = vadd.xlane.f32.xlu0 %v1621
            %v1662 = vpop.xlane.xlu0 %1661
            %1663 = vadd.xlane.f32.xlu0 %v1622
            %v1664 = vpop.xlane.xlu0 %1663
            %1665 = vadd.xlane.f32.xlu0 %v1623
            %v1666 = vpop.xlane.xlu0 %1665
            %1667 = vadd.xlane.f32.xlu0 %v1624
            %v1668 = vpop.xlane.xlu0 %1667
            %1669 = vadd.xlane.f32.xlu0 %v1625
            %v1670 = vpop.xlane.xlu0 %1669
            %1671 = vadd.xlane.f32.xlu0 %v1626
            %v1672 = vpop.xlane.xlu0 %1671
            %1673 = vadd.xlane.f32.xlu0 %v1627
            %v1674 = vpop.xlane.xlu0 %1673
            %1675 = vadd.xlane.f32.xlu0 %v1628
            %v1676 = vpop.xlane.xlu0 %1675
            %1677 = vadd.xlane.f32.xlu0 %v1629
            %v1678 = vpop.xlane.xlu0 %1677
            %1679 = vadd.xlane.f32.xlu0 %v1630
            %v1680 = vpop.xlane.xlu0 %1679
            %1681 = vadd.xlane.f32.xlu0 %v1631
            %v1682 = vpop.xlane.xlu0 %1681
            %1683 = vadd.xlane.f32.xlu0 %v1632
            %v1684 = vpop.xlane.xlu0 %1683
            %1685 = vadd.xlane.f32.xlu0 %v1633
            %v1686 = vpop.xlane.xlu0 %1685
            %1687 = vadd.xlane.f32.xlu0 %v1634
            %v1688 = vpop.xlane.xlu0 %1687
            %1689 = vadd.xlane.f32.xlu0 %v1635
            %v1690 = vpop.xlane.xlu0 %1689
            %1691 = vadd.xlane.f32.xlu0 %v1636
            %v1692 = vpop.xlane.xlu0 %1691
            %1693 = vadd.xlane.f32.xlu0 %v1637
            %v1694 = vpop.xlane.xlu0 %1693
            %1695 = vadd.xlane.f32.xlu0 %v1638
            %v1696 = vpop.xlane.xlu0 %1695
            %1697 = vadd.xlane.f32.xlu0 %v1639
            %v1698 = vpop.xlane.xlu0 %1697
            %1699 = vadd.xlane.f32.xlu0 %v1640
            %v1700 = vpop.xlane.xlu0 %1699
            %1701 = vadd.xlane.f32.xlu0 %v1641
            %v1702 = vpop.xlane.xlu0 %1701
            %1703 = vadd.xlane.f32.xlu0 %v1642
            %v1704 = vpop.xlane.xlu0 %1703
            %1705 = vadd.xlane.f32.xlu0 %v1643
            %v1706 = vpop.xlane.xlu0 %1705
            %1707 = vadd.xlane.f32.xlu0 %v1644
            %v1708 = vpop.xlane.xlu0 %1707
            %v1709 = vmul.f32 %v1449, %v1449
            %v1710 = vmul.f32 %v1450, %v1450
            %v1711 = vmul.f32 %v1451, %v1451
            %v1712 = vmul.f32 %v1452, %v1452
            %v1713 = vmul.f32 %v1453, %v1453
            %v1714 = vmul.f32 %v1454, %v1454
            %v1715 = vmul.f32 %v1455, %v1455
            %v1716 = vmul.f32 %v1456, %v1456
            %v1717 = vmul.f32 %v1457, %v1457
            %v1718 = vmul.f32 %v1458, %v1458
            %v1719 = vmul.f32 %v1459, %v1459
            %v1720 = vmul.f32 %v1460, %v1460
            %v1721 = vmul.f32 %v1461, %v1461
            %v1722 = vmul.f32 %v1462, %v1462
            %v1723 = vmul.f32 %v1463, %v1463
            %v1724 = vmul.f32 %v1464, %v1464
            %v1725 = vmul.f32 %v1465, %v1465
            %v1726 = vmul.f32 %v1466, %v1466
            %v1727 = vmul.f32 %v1467, %v1467
            %v1728 = vmul.f32 %v1468, %v1468
            %v1729 = vmul.f32 %v1469, %v1469
            %v1730 = vmul.f32 %v1470, %v1470
            %v1731 = vmul.f32 %v1471, %v1471
            %v1732 = vmul.f32 %v1472, %v1472
            %v1733 = vmul.f32 %v1473, %v1473
            %v1734 = vmul.f32 %v1474, %v1474
            %v1735 = vmul.f32 %v1475, %v1475
            %v1736 = vmul.f32 %v1476, %v1476
            %v1737 = vmul.f32 %v1477, %v1477
            %v1738 = vmul.f32 %v1478, %v1478
            %v1739 = vmul.f32 %v1479, %v1479
            %v1740 = vmul.f32 %v1480, %v1480
            %v1741 = vsub.f32 %v1577, %v1709
            %v1742 = vsub.f32 %v1578, %v1710
            %v1743 = vsub.f32 %v1579, %v1711
            %v1744 = vsub.f32 %v1580, %v1712
            %v1745 = vsub.f32 %v1581, %v1713
            %v1746 = vsub.f32 %v1582, %v1714
            %v1747 = vsub.f32 %v1583, %v1715
            %v1748 = vsub.f32 %v1584, %v1716
            %v1749 = vsub.f32 %v1585, %v1717
            %v1750 = vsub.f32 %v1586, %v1718
            %v1751 = vsub.f32 %v1587, %v1719
            %v1752 = vsub.f32 %v1588, %v1720
            %v1753 = vsub.f32 %v1589, %v1721
            %v1754 = vsub.f32 %v1590, %v1722
            %v1755 = vsub.f32 %v1591, %v1723
            %v1756 = vsub.f32 %v1592, %v1724
            %v1757 = vsub.f32 %v1593, %v1725
            %v1758 = vsub.f32 %v1594, %v1726
            %v1759 = vsub.f32 %v1595, %v1727
            %v1760 = vsub.f32 %v1596, %v1728
            %v1761 = vsub.f32 %v1597, %v1729
            %v1762 = vsub.f32 %v1598, %v1730
            %v1763 = vsub.f32 %v1599, %v1731
            %v1764 = vsub.f32 %v1600, %v1732
            %v1765 = vsub.f32 %v1601, %v1733
            %v1766 = vsub.f32 %v1602, %v1734
            %v1767 = vsub.f32 %v1603, %v1735
            %v1768 = vsub.f32 %v1604, %v1736
            %v1769 = vsub.f32 %v1605, %v1737
            %v1770 = vsub.f32 %v1606, %v1738
            %v1771 = vsub.f32 %v1607, %v1739
            %v1772 = vsub.f32 %v1608, %v1740
            %v1773 = vadd.f32 %v1741, 1e-05
            %v1774 = vadd.f32 %v1742, 1e-05
            %v1775 = vadd.f32 %v1743, 1e-05
            %v1776 = vadd.f32 %v1744, 1e-05
            %v1777 = vadd.f32 %v1745, 1e-05
            %v1778 = vadd.f32 %v1746, 1e-05
            %v1779 = vadd.f32 %v1747, 1e-05
            %v1780 = vadd.f32 %v1748, 1e-05
            %v1781 = vadd.f32 %v1749, 1e-05
            %v1782 = vadd.f32 %v1750, 1e-05
            %v1783 = vadd.f32 %v1751, 1e-05
            %v1784 = vadd.f32 %v1752, 1e-05
            %v1785 = vadd.f32 %v1753, 1e-05
            %v1786 = vadd.f32 %v1754, 1e-05
            %v1787 = vadd.f32 %v1755, 1e-05
            %v1788 = vadd.f32 %v1756, 1e-05
            %v1789 = vadd.f32 %v1757, 1e-05
            %v1790 = vadd.f32 %v1758, 1e-05
            %v1791 = vadd.f32 %v1759, 1e-05
            %v1792 = vadd.f32 %v1760, 1e-05
            %v1793 = vadd.f32 %v1761, 1e-05
            %v1794 = vadd.f32 %v1762, 1e-05
            %v1795 = vadd.f32 %v1763, 1e-05
            %v1796 = vadd.f32 %v1764, 1e-05
            %v1797 = vadd.f32 %v1765, 1e-05
            %v1798 = vadd.f32 %v1766, 1e-05
            %v1799 = vadd.f32 %v1767, 1e-05
            %v1800 = vadd.f32 %v1768, 1e-05
            %v1801 = vadd.f32 %v1769, 1e-05
            %v1802 = vadd.f32 %v1770, 1e-05
            %v1803 = vadd.f32 %v1771, 1e-05
            %v1804 = vadd.f32 %v1772, 1e-05
            %v1805 = vrsqrt.pop %v1773
            %v1806 = vrsqrt.pop %v1774
            %v1807 = vrsqrt.pop %v1775
            %v1808 = vrsqrt.pop %v1776
            %v1809 = vrsqrt.pop %v1777
            %v1810 = vrsqrt.pop %v1778
            %v1811 = vrsqrt.pop %v1779
            %v1812 = vrsqrt.pop %v1780
            %v1813 = vrsqrt.pop %v1781
            %v1814 = vrsqrt.pop %v1782
            %v1815 = vrsqrt.pop %v1783
            %v1816 = vrsqrt.pop %v1784
            %v1817 = vrsqrt.pop %v1785
            %v1818 = vrsqrt.pop %v1786
            %v1819 = vrsqrt.pop %v1787
            %v1820 = vrsqrt.pop %v1788
            %v1821 = vrsqrt.pop %v1789
            %v1822 = vrsqrt.pop %v1790
            %v1823 = vrsqrt.pop %v1791
            %v1824 = vrsqrt.pop %v1792
            %v1825 = vrsqrt.pop %v1793
            %v1826 = vrsqrt.pop %v1794
            %v1827 = vrsqrt.pop %v1795
            %v1828 = vrsqrt.pop %v1796
            %v1829 = vrsqrt.pop %v1797
            %v1830 = vrsqrt.pop %v1798
            %v1831 = vrsqrt.pop %v1799
            %v1832 = vrsqrt.pop %v1800
            %v1833 = vrsqrt.pop %v1801
            %v1834 = vrsqrt.pop %v1802
            %v1835 = vrsqrt.pop %v1803
            %v1836 = vrsqrt.pop %v1804
            %v1837 = vstv %s435
            %v1838 = vmul.f32 %v1449, %v1837
            %v1839 = vmul.f32 %v1450, %v1837
            %v1840 = vmul.f32 %v1451, %v1837
            %v1841 = vmul.f32 %v1452, %v1837
            %v1842 = vmul.f32 %v1453, %v1837
            %v1843 = vmul.f32 %v1454, %v1837
            %v1844 = vmul.f32 %v1455, %v1837
            %v1845 = vmul.f32 %v1456, %v1837
            %v1846 = vmul.f32 %v1457, %v1837
            %v1847 = vmul.f32 %v1458, %v1837
            %v1848 = vmul.f32 %v1459, %v1837
            %v1849 = vmul.f32 %v1460, %v1837
            %v1850 = vmul.f32 %v1461, %v1837
            %v1851 = vmul.f32 %v1462, %v1837
            %v1852 = vmul.f32 %v1463, %v1837
            %v1853 = vmul.f32 %v1464, %v1837
            %v1854 = vmul.f32 %v1465, %v1837
            %v1855 = vmul.f32 %v1466, %v1837
            %v1856 = vmul.f32 %v1467, %v1837
            %v1857 = vmul.f32 %v1468, %v1837
            %v1858 = vmul.f32 %v1469, %v1837
            %v1859 = vmul.f32 %v1470, %v1837
            %v1860 = vmul.f32 %v1471, %v1837
            %v1861 = vmul.f32 %v1472, %v1837
            %v1862 = vmul.f32 %v1473, %v1837
            %v1863 = vmul.f32 %v1474, %v1837
            %v1864 = vmul.f32 %v1475, %v1837
            %v1865 = vmul.f32 %v1476, %v1837
            %v1866 = vmul.f32 %v1477, %v1837
            %v1867 = vmul.f32 %v1478, %v1837
            %v1868 = vmul.f32 %v1479, %v1837
            %v1869 = vmul.f32 %v1480, %v1837
            %v1870 = vsub.f32 %v1646, %v1838
            %v1871 = vsub.f32 %v1648, %v1839
            %v1872 = vsub.f32 %v1650, %v1840
            %v1873 = vsub.f32 %v1652, %v1841
            %v1874 = vsub.f32 %v1654, %v1842
            %v1875 = vsub.f32 %v1656, %v1843
            %v1876 = vsub.f32 %v1658, %v1844
            %v1877 = vsub.f32 %v1660, %v1845
            %v1878 = vsub.f32 %v1662, %v1846
            %v1879 = vsub.f32 %v1664, %v1847
            %v1880 = vsub.f32 %v1666, %v1848
            %v1881 = vsub.f32 %v1668, %v1849
            %v1882 = vsub.f32 %v1670, %v1850
            %v1883 = vsub.f32 %v1672, %v1851
            %v1884 = vsub.f32 %v1674, %v1852
            %v1885 = vsub.f32 %v1676, %v1853
            %v1886 = vsub.f32 %v1678, %v1854
            %v1887 = vsub.f32 %v1680, %v1855
            %v1888 = vsub.f32 %v1682, %v1856
            %v1889 = vsub.f32 %v1684, %v1857
            %v1890 = vsub.f32 %v1686, %v1858
            %v1891 = vsub.f32 %v1688, %v1859
            %v1892 = vsub.f32 %v1690, %v1860
            %v1893 = vsub.f32 %v1692, %v1861
            %v1894 = vsub.f32 %v1694, %v1862
            %v1895 = vsub.f32 %v1696, %v1863
            %v1896 = vsub.f32 %v1698, %v1864
            %v1897 = vsub.f32 %v1700, %v1865
            %v1898 = vsub.f32 %v1702, %v1866
            %v1899 = vsub.f32 %v1704, %v1867
            %v1900 = vsub.f32 %v1706, %v1868
            %v1901 = vsub.f32 %v1708, %v1869
            %v1902 = vmul.f32 %v1805, %v1870
            %v1903 = vmul.f32 %v1806, %v1871
            %v1904 = vmul.f32 %v1807, %v1872
            %v1905 = vmul.f32 %v1808, %v1873
            %v1906 = vmul.f32 %v1809, %v1874
            %v1907 = vmul.f32 %v1810, %v1875
            %v1908 = vmul.f32 %v1811, %v1876
            %v1909 = vmul.f32 %v1812, %v1877
            %v1910 = vmul.f32 %v1813, %v1878
            %v1911 = vmul.f32 %v1814, %v1879
            %v1912 = vmul.f32 %v1815, %v1880
            %v1913 = vmul.f32 %v1816, %v1881
            %v1914 = vmul.f32 %v1817, %v1882
            %v1915 = vmul.f32 %v1818, %v1883
            %v1916 = vmul.f32 %v1819, %v1884
            %v1917 = vmul.f32 %v1820, %v1885
            %v1918 = vmul.f32 %v1821, %v1886
            %v1919 = vmul.f32 %v1822, %v1887
            %v1920 = vmul.f32 %v1823, %v1888
            %v1921 = vmul.f32 %v1824, %v1889
            %v1922 = vmul.f32 %v1825, %v1890
            %v1923 = vmul.f32 %v1826, %v1891
            %v1924 = vmul.f32 %v1827, %v1892
            %v1925 = vmul.f32 %v1828, %v1893
            %v1926 = vmul.f32 %v1829, %v1894
            %v1927 = vmul.f32 %v1830, %v1895
            %v1928 = vmul.f32 %v1831, %v1896
            %v1929 = vmul.f32 %v1832, %v1897
            %v1930 = vmul.f32 %v1833, %v1898
            %v1931 = vmul.f32 %v1834, %v1899
            %v1932 = vmul.f32 %v1835, %v1900
            %v1933 = vmul.f32 %v1836, %v1901
            %v1934 = vstv %s436
            %v1935 = vadd.f32 %v1902, %v1934
            %v1936 = vadd.f32 %v1903, %v1934
            %v1937 = vadd.f32 %v1904, %v1934
            %v1938 = vadd.f32 %v1905, %v1934
            %v1939 = vadd.f32 %v1906, %v1934
            %v1940 = vadd.f32 %v1907, %v1934
            %v1941 = vadd.f32 %v1908, %v1934
            %v1942 = vadd.f32 %v1909, %v1934
            %v1943 = vadd.f32 %v1910, %v1934
            %v1944 = vadd.f32 %v1911, %v1934
            %v1945 = vadd.f32 %v1912, %v1934
            %v1946 = vadd.f32 %v1913, %v1934
            %v1947 = vadd.f32 %v1914, %v1934
            %v1948 = vadd.f32 %v1915, %v1934
            %v1949 = vadd.f32 %v1916, %v1934
            %v1950 = vadd.f32 %v1917, %v1934
            %v1951 = vadd.f32 %v1918, %v1934
            %v1952 = vadd.f32 %v1919, %v1934
            %v1953 = vadd.f32 %v1920, %v1934
            %v1954 = vadd.f32 %v1921, %v1934
            %v1955 = vadd.f32 %v1922, %v1934
            %v1956 = vadd.f32 %v1923, %v1934
            %v1957 = vadd.f32 %v1924, %v1934
            %v1958 = vadd.f32 %v1925, %v1934
            %v1959 = vadd.f32 %v1926, %v1934
            %v1960 = vadd.f32 %v1927, %v1934
            %v1961 = vadd.f32 %v1928, %v1934
            %v1962 = vadd.f32 %v1929, %v1934
            %v1963 = vadd.f32 %v1930, %v1934
            %v1964 = vadd.f32 %v1931, %v1934
            %v1965 = vadd.f32 %v1932, %v1934
            %v1966 = vadd.f32 %v1933, %v1934
            %v1967 = vlaneseq
            %v1968 = vshrl.u32 %v1967, 7
            %v1969 = vadd.s32 %v1968, 8
            %v1970 = vstv %s410
            %v1971 = vadd.s32 %v1970, %v1968
            %v1972 = vadd.s32 %v1970, %v1969
            %v1973 = vlaneseq
            %v1974 = vand.u32 %v1973, 127
            %v1975 = vstv %s411
            %vm1976 = vcmp.ge.s32.totalorder %v1971, %v1975
            %vm1977 = vcmp.ge.s32.totalorder %v1972, %v1975
            %v1978 = vstv %s418
            %vm1979 = vcmp.lt.s32.totalorder %v1971, %v1978
            %vm1980 = vcmp.lt.s32.totalorder %v1972, %v1978
            %vm1981 = vmand %vm1976, %vm1979
            %vm1982 = vmand %vm1977, %vm1980
            %vm1983 = vcmp.lt.s32.totalorder %v1974, %v1971
            %vm1984 = vcmp.lt.s32.totalorder %v1974, %v1972
            %vm1985 = vmand %vm1981, %vm1983
            %vm1986 = vmand %vm1982, %vm1984
            %v1987 = vstv %s433
            %v1988 = vmul.f32 %v1935, %v1987
            %v1989 = vmul.f32 %v1936, %v1987
            %v1990 = vmul.f32 %v1937, %v1987
            %v1991 = vmul.f32 %v1938, %v1987
            %v1992 = vmul.f32 %v1939, %v1987
            %v1993 = vmul.f32 %v1940, %v1987
            %v1994 = vmul.f32 %v1941, %v1987
            %v1995 = vmul.f32 %v1942, %v1987
            %v1996 = vmul.f32 %v1943, %v1987
            %v1997 = vmul.f32 %v1944, %v1987
            %v1998 = vmul.f32 %v1945, %v1987
            %v1999 = vmul.f32 %v1946, %v1987
            %v2000 = vmul.f32 %v1947, %v1987
            %v2001 = vmul.f32 %v1948, %v1987
            %v2002 = vmul.f32 %v1949, %v1987
            %v2003 = vmul.f32 %v1950, %v1987
            %v2004 = vmul.f32 %v1951, %v1987
            %v2005 = vmul.f32 %v1952, %v1987
            %v2006 = vmul.f32 %v1953, %v1987
            %v2007 = vmul.f32 %v1954, %v1987
            %v2008 = vmul.f32 %v1955, %v1987
            %v2009 = vmul.f32 %v1956, %v1987
            %v2010 = vmul.f32 %v1957, %v1987
            %v2011 = vmul.f32 %v1958, %v1987
            %v2012 = vmul.f32 %v1959, %v1987
            %v2013 = vmul.f32 %v1960, %v1987
            %v2014 = vmul.f32 %v1961, %v1987
            %v2015 = vmul.f32 %v1962, %v1987
            %v2016 = vmul.f32 %v1963, %v1987
            %v2017 = vmul.f32 %v1964, %v1987
            %v2018 = vmul.f32 %v1965, %v1987
            %v2019 = vmul.f32 %v1966, %v1987
            %v2052 = vlaneseq
            %v2053 = vshrl.u32 %v2052, 7
            %v2054 = vsub.s32 %v1974, %v2053
            %v2055 = vrot.slane %v1988, %v2054
            %v2056 = vadd.s32 %v1974, 4294967288
            %v2057 = vlaneseq
            %v2058 = vshrl.u32 %v2057, 7
            %v2059 = vsub.s32 %v2056, %v2058
            %v2060 = vrot.slane %v1989, %v2059
            %vm2061 = vcmask 130112
            %v2062 = vsel %vm2061, %v2060, %v2055
            %v2063 = vlaneseq
            %v2064 = vshrl.u32 %v2063, 7
            %v2065 = vsub.s32 %v1974, %v2064
            %v2066 = vrot.slane %v1990, %v2065
            %v2067 = vlaneseq
            %v2068 = vshrl.u32 %v2067, 7
            %v2069 = vsub.s32 %v2056, %v2068
            %v2070 = vrot.slane %v1991, %v2069
            %v2071 = vsel %vm2061, %v2070, %v2066
            %v2072 = vlaneseq
            %v2073 = vshrl.u32 %v2072, 7
            %v2074 = vsub.s32 %v1974, %v2073
            %v2075 = vrot.slane %v1992, %v2074
            %v2076 = vlaneseq
            %v2077 = vshrl.u32 %v2076, 7
            %v2078 = vsub.s32 %v2056, %v2077
            %v2079 = vrot.slane %v1993, %v2078
            %v2080 = vsel %vm2061, %v2079, %v2075
            %v2081 = vlaneseq
            %v2082 = vshrl.u32 %v2081, 7
            %v2083 = vsub.s32 %v1974, %v2082
            %v2084 = vrot.slane %v1994, %v2083
            %v2085 = vlaneseq
            %v2086 = vshrl.u32 %v2085, 7
            %v2087 = vsub.s32 %v2056, %v2086
            %v2088 = vrot.slane %v1995, %v2087
            %v2089 = vsel %vm2061, %v2088, %v2084
            %v2090 = vlaneseq
            %v2091 = vshrl.u32 %v2090, 7
            %v2092 = vsub.s32 %v1974, %v2091
            %v2093 = vrot.slane %v1996, %v2092
            %v2094 = vlaneseq
            %v2095 = vshrl.u32 %v2094, 7
            %v2096 = vsub.s32 %v2056, %v2095
            %v2097 = vrot.slane %v1997, %v2096
            %v2098 = vsel %vm2061, %v2097, %v2093
            %v2099 = vlaneseq
            %v2100 = vshrl.u32 %v2099, 7
            %v2101 = vsub.s32 %v1974, %v2100
            %v2102 = vrot.slane %v1998, %v2101
            %v2103 = vlaneseq
            %v2104 = vshrl.u32 %v2103, 7
            %v2105 = vsub.s32 %v2056, %v2104
            %v2106 = vrot.slane %v1999, %v2105
            %v2107 = vsel %vm2061, %v2106, %v2102
            %v2108 = vlaneseq
            %v2109 = vshrl.u32 %v2108, 7
            %v2110 = vsub.s32 %v1974, %v2109
            %v2111 = vrot.slane %v2000, %v2110
            %v2112 = vlaneseq
            %v2113 = vshrl.u32 %v2112, 7
            %v2114 = vsub.s32 %v2056, %v2113
            %v2115 = vrot.slane %v2001, %v2114
            %v2116 = vsel %vm2061, %v2115, %v2111
            %v2117 = vlaneseq
            %v2118 = vshrl.u32 %v2117, 7
            %v2119 = vsub.s32 %v1974, %v2118
            %v2120 = vrot.slane %v2002, %v2119
            %v2121 = vlaneseq
            %v2122 = vshrl.u32 %v2121, 7
            %v2123 = vsub.s32 %v2056, %v2122
            %v2124 = vrot.slane %v2003, %v2123
            %v2125 = vsel %vm2061, %v2124, %v2120
            %v2126 = vlaneseq
            %v2127 = vshrl.u32 %v2126, 7
            %v2128 = vsub.s32 %v1974, %v2127
            %v2129 = vrot.slane %v2004, %v2128
            %v2130 = vlaneseq
            %v2131 = vshrl.u32 %v2130, 7
            %v2132 = vsub.s32 %v2056, %v2131
            %v2133 = vrot.slane %v2005, %v2132
            %v2134 = vsel %vm2061, %v2133, %v2129
            %v2135 = vlaneseq
            %v2136 = vshrl.u32 %v2135, 7
            %v2137 = vsub.s32 %v1974, %v2136
            %v2138 = vrot.slane %v2006, %v2137
            %v2139 = vlaneseq
            %v2140 = vshrl.u32 %v2139, 7
            %v2141 = vsub.s32 %v2056, %v2140
            %v2142 = vrot.slane %v2007, %v2141
            %v2143 = vsel %vm2061, %v2142, %v2138
            %v2144 = vlaneseq
            %v2145 = vshrl.u32 %v2144, 7
            %v2146 = vsub.s32 %v1974, %v2145
            %v2147 = vrot.slane %v2008, %v2146
            %v2148 = vlaneseq
            %v2149 = vshrl.u32 %v2148, 7
            %v2150 = vsub.s32 %v2056, %v2149
            %v2151 = vrot.slane %v2009, %v2150
            %v2152 = vsel %vm2061, %v2151, %v2147
            %v2153 = vlaneseq
            %v2154 = vshrl.u32 %v2153, 7
            %v2155 = vsub.s32 %v1974, %v2154
            %v2156 = vrot.slane %v2010, %v2155
            %v2157 = vlaneseq
            %v2158 = vshrl.u32 %v2157, 7
            %v2159 = vsub.s32 %v2056, %v2158
            %v2160 = vrot.slane %v2011, %v2159
            %v2161 = vsel %vm2061, %v2160, %v2156
            %v2162 = vlaneseq
            %v2163 = vshrl.u32 %v2162, 7
            %v2164 = vsub.s32 %v1974, %v2163
            %v2165 = vrot.slane %v2012, %v2164
            %v2166 = vlaneseq
            %v2167 = vshrl.u32 %v2166, 7
            %v2168 = vsub.s32 %v2056, %v2167
            %v2169 = vrot.slane %v2013, %v2168
            %v2170 = vsel %vm2061, %v2169, %v2165
            %v2171 = vlaneseq
            %v2172 = vshrl.u32 %v2171, 7
            %v2173 = vsub.s32 %v1974, %v2172
            %v2174 = vrot.slane %v2014, %v2173
            %v2175 = vlaneseq
            %v2176 = vshrl.u32 %v2175, 7
            %v2177 = vsub.s32 %v2056, %v2176
            %v2178 = vrot.slane %v2015, %v2177
            %v2179 = vsel %vm2061, %v2178, %v2174
            %v2180 = vlaneseq
            %v2181 = vshrl.u32 %v2180, 7
            %v2182 = vsub.s32 %v1974, %v2181
            %v2183 = vrot.slane %v2016, %v2182
            %v2184 = vlaneseq
            %v2185 = vshrl.u32 %v2184, 7
            %v2186 = vsub.s32 %v2056, %v2185
            %v2187 = vrot.slane %v2017, %v2186
            %v2188 = vsel %vm2061, %v2187, %v2183
            %v2189 = vlaneseq
            %v2190 = vshrl.u32 %v2189, 7
            %v2191 = vsub.s32 %v1974, %v2190
            %v2192 = vrot.slane %v2018, %v2191
            %v2193 = vlaneseq
            %v2194 = vshrl.u32 %v2193, 7
            %v2195 = vsub.s32 %v2056, %v2194
            %v2196 = vrot.slane %v2019, %v2195
            %v2197 = vsel %vm2061, %v2196, %v2192
            %vm2198 = vcmask 1041409
            %v2199 = vsel %vm2198, %v2071, %v2062
            %vm2200 = vcmask 1042434
            %v2201 = vsel %vm2200, %v2080, %v2199
            %vm2202 = vcmask 1043459
            %v2203 = vsel %vm2202, %v2089, %v2201
            %vm2204 = vcmask 1044484
            %v2205 = vsel %vm2204, %v2098, %v2203
            %vm2206 = vcmask 1045509
            %v2207 = vsel %vm2206, %v2107, %v2205
            %vm2208 = vcmask 1046534
            %v2209 = vsel %vm2208, %v2116, %v2207
            %vm2210 = vcmask 1047559
            %v2211 = vsel %vm2210, %v2125, %v2209
            %v2212 = vsel %vm2198, %v2143, %v2134
            %v2213 = vsel %vm2200, %v2152, %v2212
            %v2214 = vsel %vm2202, %v2161, %v2213
            %v2215 = vsel %vm2204, %v2170, %v2214
            %v2216 = vsel %vm2206, %v2179, %v2215
            %v2217 = vsel %vm2208, %v2188, %v2216
            %v2218 = vsel %vm2210, %v2197, %v2217
            %v2221 = vsel %vm1985, %v2211, -1e+30
            %v2222 = vsel %vm1986, %v2218, -1e+30
            %2223 = vst.msk [vmem:[#allocation2] sm:$0xff] %vm455, %v2221
            %2224 = vst.msk [vmem:[#allocation2 + $0x8] sm:$0xff] %vm455, %v2222
          $region84: #{tpu_custom_call.1} parent=79 // pred_fallthru
            _
          %v2225 = vld [vmem:[#allocation2] sm:$0xff]
          %v2226 = vld [vmem:[#allocation2 + $0x8] sm:$0xff]
          %v2227 = vsel %vm455, %v2225, -inf
          %2228 = vmax.xlane.f32.xlu0 %v2227
          %v2229 = vpop.xlane.xlu0 %2228
          %v2230 = vsel %vm455, %v2226, -inf
          %2231 = vmax.xlane.f32.xlu0 %v2230
          %v2232 = vpop.xlane.xlu0 %2231
          %vm2233 = vcmp.gt.f32.partialorder %v2225, -1e+29
          %vm2234 = vcmp.gt.f32.partialorder %v2226, -1e+29
          %v2235 = vsub.f32 %v2225, %v2229
          %v2236 = vsub.f32 %v2226, %v2232
          %v2237 = vmul.f32 %v2235, 1.442695
          %v2238 = vpow.pop %v2237
          %v2239 = vmul.f32 %v2236, 1.442695
          %v2240 = vpow.pop %v2239
          %v2241 = vsel %vm2233, %v2238, 0.0
          %v2242 = vsel %vm2234, %v2240, 0.0
          %v2243 = vsel %vm455, %v2241, 0.0
          %2244 = vadd.xlane.f32.xlu0 %v2243
          %v2245 = vpop.xlane.xlu0 %2244
          %v2246 = vsel %vm455, %v2242, 0.0
          %2247 = vadd.xlane.f32.xlu0 %v2246
          %v2248 = vpop.xlane.xlu0 %2247
          %v2249 = vstv %s434
          %v2250 = vmul.f32 %v2249, %v2245
          %v2251 = vmul.f32 %v2249, %v2248
          %vm2252 = vcmp.gt.f32.partialorder %v2241, %v2250
          %vm2253 = vcmp.gt.f32.partialorder %v2242, %v2251
          %v2254 = vsel %vm2252, 1.0, 0.0
          %v2255 = vsel %vm2253, 1.0, 0.0
          %2256 = vst.msk [vmem:[%s406] sm:$0xff] %vm455, %v2254
          %2257 = vst.msk [vmem:[%s406 + $0x8] sm:$0xff] %vm455, %v2255
        $region80: #{tpu_custom_call.1} parent=47 // pred_fallthru
          _
        %s2258 = sand.u32 %s211, 1
        %s2259 = scalar_lea.sflag [#allocation5], %s2258
        %s2260 = sand.u32 %s211, 1
        %s2261 = smul.addr %s2260, 16
        %s2262 = scalar_lea.vmem [#allocation15], %s2261
        // Predicated region
        $region85: #{tpu_custom_call.1} parent=47 // pred_check
          %p2263 = pneg %p221
        $region86: #{tpu_custom_call.1} parent=47 // pred_check_branch
          %2265 = sbr.rel (%p2263) target = $region88
        $region87: #{tpu_custom_call.1} parent=47 // pred_region
          %s2266 = smul.u32 2, %s35
          %s2268 = ssub.s32 256, 256
          %2269 = vsyncadd %s2259, %s2268
          %s2270 = smul.addr %s34, 2
          %s2271 = sadd.s32 %s2266, %s2270
          %s2272 = smul.addr %s2271, 128
          %s2273 = scalar_lea.hbm %s7, %s2272
          %s2274 = sshll.u32 %s2262, 4
          %s2275 = int_to_ptr.vmem [resolvable:$true] %s2274
          %2280 = dma.vmem_to_hbm [thread:$0]  %s2275, 256, %s2273, %s2259, 128, 128, 8
        $region88: #{tpu_custom_call.1} parent=47 // pred_fallthru
          _
      $region48: #{tpu_custom_call.1} parent=5 // pred_fallthru
        _
      %p2281 = scmp.le.s32.totalorder 2, %s25
      // Predicated region
      $region89: #{tpu_custom_call.1} parent=5 // pred_check
        %p2282 = pneg %p2281
      $region90: #{tpu_custom_call.1} parent=5 // pred_check_branch
        %2284 = sbr.rel (%p2282) target = $region92
      $region91: #{tpu_custom_call.1} parent=5 // pred_region
        %s2285 = ssub.s32 %s25, 2
        // Predicated region
        $region93: #{tpu_custom_call.1} parent=91 // pred_check
          %p2286 = pneg %p227
        $region94: #{tpu_custom_call.1} parent=91 // pred_check_branch
          %2288 = sbr.rel (%p2286) target = $region96
        $region95: #{tpu_custom_call.1} parent=91 // pred_region
          %s2289 = sand.u32 %s212, 1
          %s2290 = scalar_lea.sflag [#allocation5], %s2289
          %s2291 = sand.u32 %s212, 1
          %s2292 = smul.addr %s2291, 16
          %s2293 = scalar_lea.vmem [#allocation15], %s2292
          %2294 = dma.done %s2290, 256
        $region96: #{tpu_custom_call.1} parent=91 // pred_fallthru
          _
      $region92: #{tpu_custom_call.1} parent=5 // pred_fallthru
        _
    $region6: #{tpu_custom_call.1} parent=1 // loop_footer
      %s29 = sadd.s32 1, %s25
    $region7: #{tpu_custom_call.1} parent=1 // loop_footer_branch
      %24 = sbr.rel target = $region3
    $region8: #{tpu_custom_call.1} parent=1 // loop_exit
      _
    %2295 = vsyncpa [#allocation4], 1
    %s2296 = scalar_lea.sflag [#allocation4], 1
    %2297 = vsyncpa %s2296, 1
    %2298 = vsyncpa [#allocation11], 1
    %s2299 = scalar_lea.sflag [#allocation11], 1
    %2300 = vsyncpa %s2299, 1
    %2301 = vsyncpa [#allocation5], 1
    %s2302 = scalar_lea.sflag [#allocation5], 1
    %2303 = vsyncpa %s2302, 1
    %2304 = vsyncpa [#allocation6], 1
    %s2305 = scalar_lea.sflag [#allocation6], 1
    %2306 = vsyncpa %s2305, 1
    %2307 = vsyncpa [#allocation7], 1
    %s2308 = scalar_lea.sflag [#allocation7], 1
    %2309 = vsyncpa %s2308, 1
    %2310 = vsyncpa [#allocation14], 1

</llo_original>
